<compile_context>
chip_gen: v7x
topology: tpu7x:2x2x1
jax: 0.10.0
libtpu: 0.0.40
codegen_flags: <defaults>
</compile_context>

<pallas_src>
import math
import functools

import jax
import jax.numpy as jnp
from jax.experimental import pallas as pl
from jax.experimental.pallas import tpu as pltpu


_LN_EPS = 1e-5   # PyTorch nn.LayerNorm default


# ----------------------------------------------------------------------------
# Per-generation configuration
# ----------------------------------------------------------------------------
def _tpu_config():
    """VMEM-capacity-aware config.

    v5e/v6e: 128 MiB VMEM, single TensorCore -> one fat grid step, large row
    tiles, ~100 MiB scoped-VMEM limit.  v7x: 64 MiB VMEM, 2 TCs -> leave
    headroom under 64 MiB and keep >= 2 grid steps so both cores get work.
    """
    vmem_cap = 128 * 1024 * 1024
    try:
        vmem_cap = int(pltpu.get_tpu_info().vmem_capacity_bytes)
    except Exception:
        pass  # fall back to conservative defaults
    single_core = vmem_cap >= 96 * 1024 * 1024            # v5e / v6e
    vmem_limit = max(32 * 1024 * 1024,
                     min(vmem_cap - 16 * 1024 * 1024, 100 * 1024 * 1024))
    row_target = 1024 if single_core else 512
    return {"single_core": single_core,
            "vmem_limit": vmem_limit,
            "row_target": row_target}


# ----------------------------------------------------------------------------
# Block-size helpers
# ----------------------------------------------------------------------------
def _batch_block(B, T, S, D, H, itemsize, vmem_budget, multi_step):
    """Largest divisor of B whose per-step working set fits the VMEM budget.
    On multi-TC chips (v7x) prefer >= 2 grid steps for megacore sharding."""
    def step_bytes(bb):
        acts = bb * (T + 2 * S) * D * (itemsize + 4)       # x/mem + q/k/v (+f32 copies)
        scores = bb * H * T * S * 4 * 2                    # f32 scores + probs
        ctx = bb * T * D * 4 * 2                           # f32 ctx + residual
        return 2 * (acts + scores + ctx)                   # double-buffer / slack
    cands = [d for d in range(1, B + 1) if B % d == 0 and step_bytes(d) < vmem_budget]
    if not cands:
        cands = [1]
    bb = max(cands)
    if multi_step and bb == B and B >= 2:
        halves = [d for d in cands if d <= B // 2]
        if halves:
            bb = max(halves)
    return bb


def _row_block(n, target):
    """Largest multiple-of-8 divisor of n that is <= target (fat row tiles)."""
    cands = [d for d in range(8, min(n, target) + 1, 8) if n % d == 0]
    return max(cands) if cands else n


def _f_block(F, target=512):
    """Multiple-of-128 divisor of the FFN hidden dim for F-axis streaming."""
    cands = [d for d in range(128, min(F, target) + 1, 128) if F % d == 0]
    return max(cands) if cands else F


def _const_spec(shape, grid_rank):
    """Spec for grid-constant weights/biases: whole array, single-buffered."""
    if grid_rank == 1:
        imap = lambda i: (0,) * len(shape)
    else:
        imap = lambda i, j: (0,) * len(shape)
    return pl.BlockSpec(shape, imap, pipeline_mode=pl.Buffered(1))


# ----------------------------------------------------------------------------
# Kernel A/B: multi-head attention + residual add + LayerNorm (fused)
# ----------------------------------------------------------------------------
def _attn_add_ln_kernel(*refs, nhead, self_attn, eps, approx_recip):
    if self_attn:
        (x_ref, wqkv_ref, bqkv_ref, wo_ref, bo_ref, g_ref, b_ref, o_ref) = refs
    else:
        (x_ref, m_ref, wq_ref, bq_ref, wkv_ref, bkv_ref,
         wo_ref, bo_ref, g_ref, b_ref, o_ref) = refs

    x = x_ref[...]                                    # (Bb, T, D) bf16
    Bb, T, D = x.shape
    H = nhead
    hd = D // H
    scale = 1.0 / math.sqrt(hd)
    dt = x.dtype
    x2 = x.reshape(Bb * T, D)

    if self_attn:
        # One (D, 3D) bf16 projection matmul (f32 accumulation) for Q, K, V.
        qkv = jnp.dot(x2, wqkv_ref[...],
                      preferred_element_type=jnp.float32) + bqkv_ref[...]
        q2, k2, v2 = qkv[:, :D], qkv[:, D:2 * D], qkv[:, 2 * D:]
        S = T
    else:
        m = m_ref[...]                                # (Bb, S, D)
        S = m.shape[1]
        m2 = m.reshape(Bb * S, D)
        q2 = jnp.dot(x2, wq_ref[...],
                     preferred_element_type=jnp.float32) + bq_ref[...]
        kv = jnp.dot(m2, wkv_ref[...],
                     preferred_element_type=jnp.float32) + bkv_ref[...]
        k2, v2 = kv[:, :D], kv[:, D:]

    q3 = q2.astype(dt).reshape(Bb, T, D)
    k3 = k2.astype(dt).reshape(Bb, S, D)
    v3 = v2.astype(dt).reshape(Bb, S, D)

    # Per-head attention.  Kept as a short static unroll (H is small): Mosaic's
    # in-kernel dot_general/transpose only supports a single leading batch dim,
    # so the 2-batch-dim (b,h) einsum form is not used.  All MXU-heavy work is
    # properly shaped: contexts are concatenated along lanes and the output
    # projection is ONE dense (Bb*T, D) @ (D, D) matmul (no K=hd matmuls and no
    # per-head f32 accumulator adds).
    # TODO(synk): for realistic T / long S, move (batch, head, q-tile) onto the
    # pallas grid with flash-style online softmax so VMEM is independent of S.
    ctx_heads = []
    for h in range(H):
        sl = slice(h * hd, (h + 1) * hd)
        qh, kh, vh = q3[:, :, sl], k3[:, :, sl], v3[:, :, sl]
        s = jnp.einsum('btd,bsd->bts', qh, kh,
                       preferred_element_type=jnp.float32) * scale
        s = s - jnp.max(s, axis=-1, keepdims=True)
        p = jnp.exp(s)
        denom = jnp.sum(p, axis=-1, keepdims=True)
        if approx_recip:
            p = p * pl.reciprocal(denom, approx=True)       # EUP slot
        else:
            p = p / denom                                   # exact (parity tests)
        ctx_heads.append(jnp.einsum('bts,bsd->btd', p.astype(dt), vh,
                                    preferred_element_type=jnp.float32))

    # Heads concatenated along lanes -> single dense output projection.
    ctx = jnp.concatenate(ctx_heads, axis=-1).reshape(Bb * T, D).astype(dt)
    attn = jnp.dot(ctx, wo_ref[...],
                   preferred_element_type=jnp.float32) + bo_ref[...]

    # residual add + LayerNorm in f32 (biased variance, eps like PyTorch)
    res = x2.astype(jnp.float32) + attn
    mean = jnp.mean(res, axis=-1, keepdims=True)
    cen = res - mean
    var = jnp.mean(cen * cen, axis=-1, keepdims=True)
    y = cen * jax.lax.rsqrt(var + eps) * g_ref[...] + b_ref[...]
    o_ref[...] = y.reshape(Bb, T, D).astype(o_ref.dtype)


def self_attn_add_ln(x, p_attn, p_ln, *, nhead, cfg, eps=_LN_EPS, approx_recip=True):
    B, T, D = x.shape
    Bb = _batch_block(B, T, T, D, nhead, x.dtype.itemsize,
                      cfg["vmem_limit"] // 2, not cfg["single_core"])
    grid = (B // Bb,)
    wbytes = p_attn["wqkv"].dtype.itemsize
    cost = pl.CostEstimate(
        flops=int(2 * B * T * D * 3 * D + 4 * B * T * T * D + 2 * B * T * D * D),
        transcendentals=int(nhead * B * T * T),
        bytes_accessed=int(2 * B * T * D * x.dtype.itemsize + 4 * D * D * wbytes),
    )
    kernel = functools.partial(_attn_add_ln_kernel, nhead=nhead, self_attn=True,
                               eps=eps, approx_recip=approx_recip)
    return pl.pallas_call(
        kernel,
        out_shape=jax.ShapeDtypeStruct((B, T, D), x.dtype),
        grid=grid,
        in_specs=[
            pl.BlockSpec((Bb, T, D), lambda i: (i, 0, 0)),
            _const_spec((D, 3 * D), 1), _const_spec((1, 3 * D), 1),
            _const_spec((D, D), 1), _const_spec((1, D), 1),
            _const_spec((1, D), 1), _const_spec((1, D), 1),
        ],
        out_specs=pl.BlockSpec((Bb, T, D), lambda i: (i, 0, 0)),
        compiler_params=pltpu.CompilerParams(
            dimension_semantics=("parallel",),
            vmem_limit_bytes=cfg["vmem_limit"]),
        cost_estimate=cost,
    )(x, p_attn["wqkv"], p_attn["bqkv"], p_attn["wo"], p_attn["bo"],
      p_ln["gamma"], p_ln["beta"])


def cross_attn_add_ln(x, mem, p_attn, p_ln, *, nhead, cfg, eps=_LN_EPS,
                      approx_recip=True):
    B, T, D = x.shape
    _, S, _ = mem.shape
    Bb = _batch_block(B, T, S, D, nhead, x.dtype.itemsize,
                      cfg["vmem_limit"] // 2, not cfg["single_core"])
    grid = (B // Bb,)
    wbytes = p_attn["wq"].dtype.itemsize
    cost = pl.CostEstimate(
        flops=int(2 * B * T * D * D + 4 * B * S * D * D
                  + 4 * B * T * S * D + 2 * B * T * D * D),
        transcendentals=int(nhead * B * T * S),
        bytes_accessed=int((2 * B * T * D + B * S * D) * x.dtype.itemsize
                           + 4 * D * D * wbytes),
    )
    kernel = functools.partial(_attn_add_ln_kernel, nhead=nhead, self_attn=False,
                               eps=eps, approx_recip=approx_recip)
    return pl.pallas_call(
        kernel,
        out_shape=jax.ShapeDtypeStruct((B, T, D), x.dtype),
        grid=grid,
        in_specs=[
            pl.BlockSpec((Bb, T, D), lambda i: (i, 0, 0)),
            pl.BlockSpec((Bb, S, D), lambda i: (i, 0, 0)),
            _const_spec((D, D), 1), _const_spec((1, D), 1),
            _const_spec((D, 2 * D), 1), _const_spec((1, 2 * D), 1),
            _const_spec((D, D), 1), _const_spec((1, D), 1),
            _const_spec((1, D), 1), _const_spec((1, D), 1),
        ],
        out_specs=pl.BlockSpec((Bb, T, D), lambda i: (i, 0, 0)),
        compiler_params=pltpu.CompilerParams(
            dimension_semantics=("parallel",),
            vmem_limit_bytes=cfg["vmem_limit"]),
        cost_estimate=cost,
    )(x, mem, p_attn["wq"], p_attn["bq"], p_attn["wkv"], p_attn["bkv"],
      p_attn["wo"], p_attn["bo"], p_ln["gamma"], p_ln["beta"])


# ----------------------------------------------------------------------------
# Kernel C: FFN (linear1 -> ReLU -> linear2) + residual add + LayerNorm (fused),
# with the dim_feedforward (F) axis streamed over the grid ("arbitrary") and a
# pl.when-initialized f32 accumulator (VMEM-safe on v7x at realistic F).
# ----------------------------------------------------------------------------
def _ffn_add_ln_kernel(x_ref, w1_ref, b1_ref, w2_ref, b2_ref, g_ref, b_ref,
                       o_ref, acc_ref, *, eps):
    f = pl.program_id(1)

    @pl.when(f == 0)
    def _():
        acc_ref[...] = jnp.zeros_like(acc_ref)

    x = x_ref[...]                                                  # (Rb, D) bf16
    h = jnp.dot(x, w1_ref[...], preferred_element_type=jnp.float32) + b1_ref[...]
    h = jnp.maximum(h, 0.0)                                         # ReLU
    acc_ref[...] += jnp.dot(h.astype(x.dtype), w2_ref[...],
                            preferred_element_type=jnp.float32)

    @pl.when(f == pl.num_programs(1) - 1)
    def _():
        res = x.astype(jnp.float32) + acc_ref[...] + b2_ref[...]
        mean = jnp.mean(res, axis=-1, keepdims=True)
        cen = res - mean
        var = jnp.mean(cen * cen, axis=-1, keepdims=True)
        out = cen * jax.lax.rsqrt(var + eps) * g_ref[...] + b_ref[...]
        o_ref[...] = out.astype(o_ref.dtype)


def ffn_add_ln(x, p_ffn, p_ln, *, cfg, eps=_LN_EPS):
    B, T, D = x.shape
    F = p_ffn["w1"].shape[1]
    R = B * T
    x2 = x.reshape(R, D)                     # flattened rows -> fat lane-dense tiles
    Rb = _row_block(R, cfg["row_target"])
    Fb = _f_block(F)
    grid = (R // Rb, F // Fb)
    wbytes = p_ffn["w1"].dtype.itemsize
    cost = pl.CostEstimate(
        flops=int(4 * R * D * F),
        transcendentals=0,
        bytes_accessed=int(2 * R * D * x.dtype.itemsize + 2 * D * F * wbytes),
    )
    out = pl.pallas_call(
        functools.partial(_ffn_add_ln_kernel, eps=eps),
        out_shape=jax.ShapeDtypeStruct((R, D), x.dtype),
        grid=grid,
        in_specs=[
            pl.BlockSpec((Rb, D), lambda r, f: (r, 0)),
            pl.BlockSpec((D, Fb), lambda r, f: (0, f)),     # w1 streamed over F
            pl.BlockSpec((1, Fb), lambda r, f: (0, f)),     # b1 streamed over F
            pl.BlockSpec((Fb, D), lambda r, f: (f, 0)),     # w2 streamed over F
            _const_spec((1, D), 2),                         # b2
            _const_spec((1, D), 2), _const_spec((1, D), 2), # gamma, beta
        ],
        out_specs=pl.BlockSpec((Rb, D), lambda r, f: (r, 0)),
        scratch_shapes=[pltpu.VMEM((Rb, D), jnp.float32)],
        compiler_params=pltpu.CompilerParams(
            dimension_semantics=("parallel", "arbitrary"),
            vmem_limit_bytes=cfg["vmem_limit"]),
        cost_estimate=cost,
    )(x2, p_ffn["w1"], p_ffn["b1"], p_ffn["w2"], p_ffn["b2"],
      p_ln["gamma"], p_ln["beta"])
    return out.reshape(B, T, D)


# ----------------------------------------------------------------------------
# Full decoder layer (3 fused pallas_calls)
# ----------------------------------------------------------------------------
def transformer_decoder_layer(tgt, memory, params, *, nhead,
                              compute_dtype=jnp.bfloat16, approx_recip=True):
    # TODO(synk): tgt_mask / memory_mask / key_padding_mask paths not implemented
    # (eval-mode, no masks, dropout = identity).
    cfg = _tpu_config()
    x = tgt.astype(compute_dtype)
    mem = memory.astype(compute_dtype)
    x = self_attn_add_ln(x, params["self_attn"], params["norm1"], nhead=nhead,
                         cfg=cfg, approx_recip=approx_recip)
    x = cross_attn_add_ln(x, mem, params["cross_attn"], params["norm2"],
                          nhead=nhead, cfg=cfg, approx_recip=approx_recip)
    x = ffn_add_ln(x, params["ffn"], params["norm3"], cfg=cfg)
    return x


# ----------------------------------------------------------------------------
# Deterministic parameter init (shapes follow the PyTorch module's __init__).
# Linear / in_proj weights are stored pre-transposed (bf16) so kernels compute
# x @ W with f32 accumulation; Q/K/V concatenated (D,3D) for self-attn, K/V
# (D,2D) for cross-attn.  Biases and LayerNorm params stay f32.
# ----------------------------------------------------------------------------
def init_params(key, d_model, dim_feedforward, wdtype=jnp.bfloat16):
    def w(k, shape, scale=0.02):
        return (scale * jax.random.normal(k, shape)).astype(wdtype)

    keys = jax.random.split(key, 8)

    self_attn = {
        "wqkv": w(keys[0], (d_model, 3 * d_model)),
        "bqkv": jnp.zeros((1, 3 * d_model), jnp.float32),
        "wo": w(keys[1], (d_model, d_model)),
        "bo": jnp.zeros((1, d_model), jnp.float32),
    }
    cross_attn = {
        "wq": w(keys[2], (d_model, d_model)),
        "bq": jnp.zeros((1, d_model), jnp.float32),
        "wkv": w(keys[3], (d_model, 2 * d_model)),
        "bkv": jnp.zeros((1, 2 * d_model), jnp.float32),
        "wo": w(keys[4], (d_model, d_model)),
        "bo": jnp.zeros((1, d_model), jnp.float32),
    }
    ffn = {
        "w1": w(keys[5], (d_model, dim_feedforward)),
        "b1": jnp.zeros((1, dim_feedforward), jnp.float32),
        "w2": w(keys[6], (dim_feedforward, d_model)),
        "b2": jnp.zeros((1, d_model), jnp.float32),
    }

    def ln_params():
        return {"gamma": jnp.ones((1, d_model), jnp.float32),
                "beta": jnp.zeros((1, d_model), jnp.float32)}

    return {"self_attn": self_attn, "cross_attn": cross_attn, "ffn": ffn,
            "norm1": ln_params(), "norm2": ln_params(), "norm3": ln_params()}


if __name__ == "__main__":
    B, T, S, D = 4, 8, 16, 128        # batch, tgt len, memory len, d_model (lane-dense)
    NHEAD = 4
    DIM_FF = 256

    key = jax.random.PRNGKey(0)
    k_tgt, k_mem, k_par = jax.random.split(key, 3)
    tgt = jax.random.normal(k_tgt, (B, T, D), jnp.float32)
    memory = jax.random.normal(k_mem, (B, S, D), jnp.float32)
    params = init_params(k_par, D, DIM_FF)

    out = transformer_decoder_layer(tgt, memory, params, nhead=NHEAD)
    out = jax.block_until_ready(out)
    assert out.shape == (B, T, D)
    assert jnp.all(jnp.isfinite(out.astype(jnp.float32)))
    print("KERNEL_OK")
</pallas_src>

<mosaic_0001>
module attributes {stable_mosaic.version = 11 : i64} {
  func.func @_attn_add_ln_kernel(%arg0: i32, %arg1: memref<4x8x128xbf16, #tpu.memory_space<vmem>>, %arg2: memref<128x384xbf16, #tpu.memory_space<vmem>>, %arg3: memref<1x384xf32, #tpu.memory_space<vmem>>, %arg4: memref<128x128xbf16, #tpu.memory_space<vmem>>, %arg5: memref<1x128xf32, #tpu.memory_space<vmem>>, %arg6: memref<1x128xf32, #tpu.memory_space<vmem>>, %arg7: memref<1x128xf32, #tpu.memory_space<vmem>>, %arg8: memref<4x8x128xbf16, #tpu.memory_space<vmem>>) attributes {dimension_semantics = [#tpu.dimension_semantics<parallel>], iteration_bounds = array<i64: 1>, scalar_prefetch = 0 : i64, scratch_operands = 0 : i64, tpu.core_type = #tpu.core_type<tc>, window_params = [{transform_indices = @transform_0, window_bounds = array<i64: 4, 8, 128>}, {pipeline_mode = #tpu.pipeline_mode<synchronous>, transform_indices = @transform_1, window_bounds = array<i64: 128, 384>}, {pipeline_mode = #tpu.pipeline_mode<synchronous>, transform_indices = @transform_2, window_bounds = array<i64: 1, 384>}, {pipeline_mode = #tpu.pipeline_mode<synchronous>, transform_indices = @transform_3, window_bounds = array<i64: 128, 128>}, {pipeline_mode = #tpu.pipeline_mode<synchronous>, transform_indices = @transform_4, window_bounds = array<i64: 1, 128>}, {pipeline_mode = #tpu.pipeline_mode<synchronous>, transform_indices = @transform_5, window_bounds = array<i64: 1, 128>}, {pipeline_mode = #tpu.pipeline_mode<synchronous>, transform_indices = @transform_6, window_bounds = array<i64: 1, 128>}, {transform_indices = @transform_7, window_bounds = array<i64: 4, 8, 128>}]} {
    %c0 = arith.constant 0 : index
    %c0_0 = arith.constant 0 : index
    %c0_1 = arith.constant 0 : index
    %0 = vector.load %arg1[%c0, %c0_0, %c0_1] : memref<4x8x128xbf16, #tpu.memory_space<vmem>>, vector<4x8x128xbf16>
    %1 = vector.shape_cast %0 : vector<4x8x128xbf16> to vector<32x128xbf16>
    %c0_2 = arith.constant 0 : index
    %c0_3 = arith.constant 0 : index
    %2 = vector.load %arg2[%c0_2, %c0_3] : memref<128x384xbf16, #tpu.memory_space<vmem>>, vector<128x384xbf16>
    %cst = arith.constant dense<0.000000e+00> : vector<32x384xf32>
    %3 = tpu.matmul %1, %2, %cst {dimension_numbers = #tpu.dot_dimension_numbers<[1], [0], [0], [1], [0, 0, 1, 1], [], []>} : vector<32x128xbf16>, vector<128x384xbf16>, vector<32x384xf32> -> vector<32x384xf32>
    %c0_4 = arith.constant 0 : index
    %c0_5 = arith.constant 0 : index
    %4 = vector.load %arg3[%c0_4, %c0_5] : memref<1x384xf32, #tpu.memory_space<vmem>>, vector<1x384xf32>
    %5 = vector.broadcast %4 : vector<1x384xf32> to vector<32x384xf32>
    %6 = arith.addf %3, %5 : vector<32x384xf32>
    %7 = vector.extract_strided_slice %6 {offsets = [0, 0], sizes = [32, 128], strides = [1, 1]} : vector<32x384xf32> to vector<32x128xf32>
    %8 = vector.extract_strided_slice %6 {offsets = [0, 128], sizes = [32, 128], strides = [1, 1]} : vector<32x384xf32> to vector<32x128xf32>
    %9 = vector.extract_strided_slice %6 {offsets = [0, 256], sizes = [32, 128], strides = [1, 1]} : vector<32x384xf32> to vector<32x128xf32>
    %10 = arith.truncf %7 : vector<32x128xf32> to vector<32x128xbf16>
    %11 = vector.shape_cast %10 : vector<32x128xbf16> to vector<4x8x128xbf16>
    %12 = arith.truncf %8 : vector<32x128xf32> to vector<32x128xbf16>
    %13 = vector.shape_cast %12 : vector<32x128xbf16> to vector<4x8x128xbf16>
    %14 = arith.truncf %9 : vector<32x128xf32> to vector<32x128xbf16>
    %15 = vector.shape_cast %14 : vector<32x128xbf16> to vector<4x8x128xbf16>
    %16 = vector.extract_strided_slice %11 {offsets = [0, 0, 0], sizes = [4, 8, 32], strides = [1, 1, 1]} : vector<4x8x128xbf16> to vector<4x8x32xbf16>
    %17 = vector.extract_strided_slice %13 {offsets = [0, 0, 0], sizes = [4, 8, 32], strides = [1, 1, 1]} : vector<4x8x128xbf16> to vector<4x8x32xbf16>
    %18 = vector.extract_strided_slice %15 {offsets = [0, 0, 0], sizes = [4, 8, 32], strides = [1, 1, 1]} : vector<4x8x128xbf16> to vector<4x8x32xbf16>
    "tpu.trace_start"() <{level = 10 : i32, message = "btd,bsd->bts"}> : () -> ()
    %cst_6 = arith.constant dense<0.000000e+00> : vector<4x8x8xf32>
    %19 = tpu.matmul %16, %17, %cst_6 {dimension_numbers = #tpu.dot_dimension_numbers<[2], [2], [1], [1], [0, 0, 0, 1, 1, 1], [0], [0]>} : vector<4x8x32xbf16>, vector<4x8x32xbf16>, vector<4x8x8xf32> -> vector<4x8x8xf32>
    "tpu.trace_stop"() : () -> ()
    %cst_7 = arith.constant 0.176776692 : f32
    %20 = vector.broadcast %cst_7 : f32 to vector<4x8x8xf32>
    %21 = arith.mulf %19, %20 : vector<4x8x8xf32>
    %cst_8 = arith.constant dense<0xFF800000> : vector<4x8xf32>
    %22 = vector.multi_reduction <maximumf>, %21, %cst_8 [2] : vector<4x8x8xf32> to vector<4x8xf32>
    %23 = vector.shape_cast %22 : vector<4x8xf32> to vector<4x8x1xf32>
    %24 = vector.broadcast %23 : vector<4x8x1xf32> to vector<4x8x8xf32>
    %25 = arith.subf %21, %24 : vector<4x8x8xf32>
    %26 = math.exp %25 : vector<4x8x8xf32>
    %cst_9 = arith.constant dense<0.000000e+00> : vector<4x8xf32>
    %27 = vector.multi_reduction <add>, %26, %cst_9 [2] : vector<4x8x8xf32> to vector<4x8xf32>
    %28 = vector.shape_cast %27 : vector<4x8xf32> to vector<4x8x1xf32>
    %29 = tpu.reciprocal %28 {approx = true} : vector<4x8x1xf32> -> vector<4x8x1xf32>
    %30 = vector.broadcast %29 : vector<4x8x1xf32> to vector<4x8x8xf32>
    %31 = arith.mulf %26, %30 : vector<4x8x8xf32>
    %32 = arith.truncf %31 : vector<4x8x8xf32> to vector<4x8x8xbf16>
    "tpu.trace_start"() <{level = 10 : i32, message = "bts,bsd->btd"}> : () -> ()
    %cst_10 = arith.constant dense<0.000000e+00> : vector<4x8x32xf32>
    %33 = tpu.matmul %32, %18, %cst_10 {dimension_numbers = #tpu.dot_dimension_numbers<[2], [1], [1], [2], [0, 0, 0, 1, 1, 2], [0], [0]>} : vector<4x8x8xbf16>, vector<4x8x32xbf16>, vector<4x8x32xf32> -> vector<4x8x32xf32>
    "tpu.trace_stop"() : () -> ()
    %34 = vector.extract_strided_slice %11 {offsets = [0, 0, 32], sizes = [4, 8, 32], strides = [1, 1, 1]} : vector<4x8x128xbf16> to vector<4x8x32xbf16>
    %35 = vector.extract_strided_slice %13 {offsets = [0, 0, 32], sizes = [4, 8, 32], strides = [1, 1, 1]} : vector<4x8x128xbf16> to vector<4x8x32xbf16>
    %36 = vector.extract_strided_slice %15 {offsets = [0, 0, 32], sizes = [4, 8, 32], strides = [1, 1, 1]} : vector<4x8x128xbf16> to vector<4x8x32xbf16>
    "tpu.trace_start"() <{level = 10 : i32, message = "btd,bsd->bts"}> : () -> ()
    %cst_11 = arith.constant dense<0.000000e+00> : vector<4x8x8xf32>
    %37 = tpu.matmul %34, %35, %cst_11 {dimension_numbers = #tpu.dot_dimension_numbers<[2], [2], [1], [1], [0, 0, 0, 1, 1, 1], [0], [0]>} : vector<4x8x32xbf16>, vector<4x8x32xbf16>, vector<4x8x8xf32> -> vector<4x8x8xf32>
    "tpu.trace_stop"() : () -> ()
    %cst_12 = arith.constant 0.176776692 : f32
    %38 = vector.broadcast %cst_12 : f32 to vector<4x8x8xf32>
    %39 = arith.mulf %37, %38 : vector<4x8x8xf32>
    %cst_13 = arith.constant dense<0xFF800000> : vector<4x8xf32>
    %40 = vector.multi_reduction <maximumf>, %39, %cst_13 [2] : vector<4x8x8xf32> to vector<4x8xf32>
    %41 = vector.shape_cast %40 : vector<4x8xf32> to vector<4x8x1xf32>
    %42 = vector.broadcast %41 : vector<4x8x1xf32> to vector<4x8x8xf32>
    %43 = arith.subf %39, %42 : vector<4x8x8xf32>
    %44 = math.exp %43 : vector<4x8x8xf32>
    %cst_14 = arith.constant dense<0.000000e+00> : vector<4x8xf32>
    %45 = vector.multi_reduction <add>, %44, %cst_14 [2] : vector<4x8x8xf32> to vector<4x8xf32>
    %46 = vector.shape_cast %45 : vector<4x8xf32> to vector<4x8x1xf32>
    %47 = tpu.reciprocal %46 {approx = true} : vector<4x8x1xf32> -> vector<4x8x1xf32>
    %48 = vector.broadcast %47 : vector<4x8x1xf32> to vector<4x8x8xf32>
    %49 = arith.mulf %44, %48 : vector<4x8x8xf32>
    %50 = arith.truncf %49 : vector<4x8x8xf32> to vector<4x8x8xbf16>
    "tpu.trace_start"() <{level = 10 : i32, message = "bts,bsd->btd"}> : () -> ()
    %cst_15 = arith.constant dense<0.000000e+00> : vector<4x8x32xf32>
    %51 = tpu.matmul %50, %36, %cst_15 {dimension_numbers = #tpu.dot_dimension_numbers<[2], [1], [1], [2], [0, 0, 0, 1, 1, 2], [0], [0]>} : vector<4x8x8xbf16>, vector<4x8x32xbf16>, vector<4x8x32xf32> -> vector<4x8x32xf32>
    "tpu.trace_stop"() : () -> ()
    %52 = vector.extract_strided_slice %11 {offsets = [0, 0, 64], sizes = [4, 8, 32], strides = [1, 1, 1]} : vector<4x8x128xbf16> to vector<4x8x32xbf16>
    %53 = vector.extract_strided_slice %13 {offsets = [0, 0, 64], sizes = [4, 8, 32], strides = [1, 1, 1]} : vector<4x8x128xbf16> to vector<4x8x32xbf16>
    %54 = vector.extract_strided_slice %15 {offsets = [0, 0, 64], sizes = [4, 8, 32], strides = [1, 1, 1]} : vector<4x8x128xbf16> to vector<4x8x32xbf16>
    "tpu.trace_start"() <{level = 10 : i32, message = "btd,bsd->bts"}> : () -> ()
    %cst_16 = arith.constant dense<0.000000e+00> : vector<4x8x8xf32>
    %55 = tpu.matmul %52, %53, %cst_16 {dimension_numbers = #tpu.dot_dimension_numbers<[2], [2], [1], [1], [0, 0, 0, 1, 1, 1], [0], [0]>} : vector<4x8x32xbf16>, vector<4x8x32xbf16>, vector<4x8x8xf32> -> vector<4x8x8xf32>
    "tpu.trace_stop"() : () -> ()
    %cst_17 = arith.constant 0.176776692 : f32
    %56 = vector.broadcast %cst_17 : f32 to vector<4x8x8xf32>
    %57 = arith.mulf %55, %56 : vector<4x8x8xf32>
    %cst_18 = arith.constant dense<0xFF800000> : vector<4x8xf32>
    %58 = vector.multi_reduction <maximumf>, %57, %cst_18 [2] : vector<4x8x8xf32> to vector<4x8xf32>
    %59 = vector.shape_cast %58 : vector<4x8xf32> to vector<4x8x1xf32>
    %60 = vector.broadcast %59 : vector<4x8x1xf32> to vector<4x8x8xf32>
    %61 = arith.subf %57, %60 : vector<4x8x8xf32>
    %62 = math.exp %61 : vector<4x8x8xf32>
    %cst_19 = arith.constant dense<0.000000e+00> : vector<4x8xf32>
    %63 = vector.multi_reduction <add>, %62, %cst_19 [2] : vector<4x8x8xf32> to vector<4x8xf32>
    %64 = vector.shape_cast %63 : vector<4x8xf32> to vector<4x8x1xf32>
    %65 = tpu.reciprocal %64 {approx = true} : vector<4x8x1xf32> -> vector<4x8x1xf32>
    %66 = vector.broadcast %65 : vector<4x8x1xf32> to vector<4x8x8xf32>
    %67 = arith.mulf %62, %66 : vector<4x8x8xf32>
    %68 = arith.truncf %67 : vector<4x8x8xf32> to vector<4x8x8xbf16>
    "tpu.trace_start"() <{level = 10 : i32, message = "bts,bsd->btd"}> : () -> ()
    %cst_20 = arith.constant dense<0.000000e+00> : vector<4x8x32xf32>
    %69 = tpu.matmul %68, %54, %cst_20 {dimension_numbers = #tpu.dot_dimension_numbers<[2], [1], [1], [2], [0, 0, 0, 1, 1, 2], [0], [0]>} : vector<4x8x8xbf16>, vector<4x8x32xbf16>, vector<4x8x32xf32> -> vector<4x8x32xf32>
    "tpu.trace_stop"() : () -> ()
    %70 = vector.extract_strided_slice %11 {offsets = [0, 0, 96], sizes = [4, 8, 32], strides = [1, 1, 1]} : vector<4x8x128xbf16> to vector<4x8x32xbf16>
    %71 = vector.extract_strided_slice %13 {offsets = [0, 0, 96], sizes = [4, 8, 32], strides = [1, 1, 1]} : vector<4x8x128xbf16> to vector<4x8x32xbf16>
    %72 = vector.extract_strided_slice %15 {offsets = [0, 0, 96], sizes = [4, 8, 32], strides = [1, 1, 1]} : vector<4x8x128xbf16> to vector<4x8x32xbf16>
    "tpu.trace_start"() <{level = 10 : i32, message = "btd,bsd->bts"}> : () -> ()
    %cst_21 = arith.constant dense<0.000000e+00> : vector<4x8x8xf32>
    %73 = tpu.matmul %70, %71, %cst_21 {dimension_numbers = #tpu.dot_dimension_numbers<[2], [2], [1], [1], [0, 0, 0, 1, 1, 1], [0], [0]>} : vector<4x8x32xbf16>, vector<4x8x32xbf16>, vector<4x8x8xf32> -> vector<4x8x8xf32>
    "tpu.trace_stop"() : () -> ()
    %cst_22 = arith.constant 0.176776692 : f32
    %74 = vector.broadcast %cst_22 : f32 to vector<4x8x8xf32>
    %75 = arith.mulf %73, %74 : vector<4x8x8xf32>
    %cst_23 = arith.constant dense<0xFF800000> : vector<4x8xf32>
    %76 = vector.multi_reduction <maximumf>, %75, %cst_23 [2] : vector<4x8x8xf32> to vector<4x8xf32>
    %77 = vector.shape_cast %76 : vector<4x8xf32> to vector<4x8x1xf32>
    %78 = vector.broadcast %77 : vector<4x8x1xf32> to vector<4x8x8xf32>
    %79 = arith.subf %75, %78 : vector<4x8x8xf32>
    %80 = math.exp %79 : vector<4x8x8xf32>
    %cst_24 = arith.constant dense<0.000000e+00> : vector<4x8xf32>
    %81 = vector.multi_reduction <add>, %80, %cst_24 [2] : vector<4x8x8xf32> to vector<4x8xf32>
    %82 = vector.shape_cast %81 : vector<4x8xf32> to vector<4x8x1xf32>
    %83 = tpu.reciprocal %82 {approx = true} : vector<4x8x1xf32> -> vector<4x8x1xf32>
    %84 = vector.broadcast %83 : vector<4x8x1xf32> to vector<4x8x8xf32>
    %85 = arith.mulf %80, %84 : vector<4x8x8xf32>
    %86 = arith.truncf %85 : vector<4x8x8xf32> to vector<4x8x8xbf16>
    "tpu.trace_start"() <{level = 10 : i32, message = "bts,bsd->btd"}> : () -> ()
    %cst_25 = arith.constant dense<0.000000e+00> : vector<4x8x32xf32>
    %87 = tpu.matmul %86, %72, %cst_25 {dimension_numbers = #tpu.dot_dimension_numbers<[2], [1], [1], [2], [0, 0, 0, 1, 1, 2], [0], [0]>} : vector<4x8x8xbf16>, vector<4x8x32xbf16>, vector<4x8x32xf32> -> vector<4x8x32xf32>
    "tpu.trace_stop"() : () -> ()
    %88 = tpu.concatenate %33, %51, %69, %87 in 2 : vector<4x8x32xf32>, vector<4x8x32xf32>, vector<4x8x32xf32>, vector<4x8x32xf32> -> vector<4x8x128xf32>
    %89 = vector.shape_cast %88 : vector<4x8x128xf32> to vector<32x128xf32>
    %90 = arith.truncf %89 : vector<32x128xf32> to vector<32x128xbf16>
    %c0_26 = arith.constant 0 : index
    %c0_27 = arith.constant 0 : index
    %91 = vector.load %arg4[%c0_26, %c0_27] : memref<128x128xbf16, #tpu.memory_space<vmem>>, vector<128x128xbf16>
    %cst_28 = arith.constant dense<0.000000e+00> : vector<32x128xf32>
    %92 = tpu.matmul %90, %91, %cst_28 {dimension_numbers = #tpu.dot_dimension_numbers<[1], [0], [0], [1], [0, 0, 1, 1], [], []>} : vector<32x128xbf16>, vector<128x128xbf16>, vector<32x128xf32> -> vector<32x128xf32>
    %c0_29 = arith.constant 0 : index
    %c0_30 = arith.constant 0 : index
    %93 = vector.load %arg5[%c0_29, %c0_30] : memref<1x128xf32, #tpu.memory_space<vmem>>, vector<1x128xf32>
    %94 = vector.broadcast %93 : vector<1x128xf32> to vector<32x128xf32>
    %95 = arith.addf %92, %94 : vector<32x128xf32>
    %96 = arith.extf %1 : vector<32x128xbf16> to vector<32x128xf32>
    %97 = arith.addf %96, %95 : vector<32x128xf32>
    %cst_31 = arith.constant dense<0.000000e+00> : vector<32xf32>
    %98 = vector.multi_reduction <add>, %97, %cst_31 [1] : vector<32x128xf32> to vector<32xf32>
    %99 = vector.shape_cast %98 : vector<32xf32> to vector<32x1xf32>
    %cst_32 = arith.constant 1.280000e+02 : f32
    %100 = vector.broadcast %cst_32 : f32 to vector<32x1xf32>
    %101 = arith.divf %99, %100 : vector<32x1xf32>
    %102 = vector.broadcast %101 : vector<32x1xf32> to vector<32x128xf32>
    %103 = arith.subf %97, %102 : vector<32x128xf32>
    %104 = arith.mulf %103, %103 : vector<32x128xf32>
    %cst_33 = arith.constant dense<0.000000e+00> : vector<32xf32>
    %105 = vector.multi_reduction <add>, %104, %cst_33 [1] : vector<32x128xf32> to vector<32xf32>
    %106 = vector.shape_cast %105 : vector<32xf32> to vector<32x1xf32>
    %cst_34 = arith.constant 1.280000e+02 : f32
    %107 = vector.broadcast %cst_34 : f32 to vector<32x1xf32>
    %108 = arith.divf %106, %107 : vector<32x1xf32>
    %cst_35 = arith.constant 9.99999974E-6 : f32
    %109 = vector.broadcast %cst_35 : f32 to vector<32x1xf32>
    %110 = arith.addf %108, %109 : vector<32x1xf32>
    %111 = math.rsqrt %110 : vector<32x1xf32>
    %112 = vector.broadcast %111 : vector<32x1xf32> to vector<32x128xf32>
    %113 = arith.mulf %103, %112 : vector<32x128xf32>
    %c0_36 = arith.constant 0 : index
    %c0_37 = arith.constant 0 : index
    %114 = vector.load %arg6[%c0_36, %c0_37] : memref<1x128xf32, #tpu.memory_space<vmem>>, vector<1x128xf32>
    %115 = vector.broadcast %114 : vector<1x128xf32> to vector<32x128xf32>
    %116 = arith.mulf %113, %115 : vector<32x128xf32>
    %c0_38 = arith.constant 0 : index
    %c0_39 = arith.constant 0 : index
    %117 = vector.load %arg7[%c0_38, %c0_39] : memref<1x128xf32, #tpu.memory_space<vmem>>, vector<1x128xf32>
    %118 = vector.broadcast %117 : vector<1x128xf32> to vector<32x128xf32>
    %119 = arith.addf %116, %118 : vector<32x128xf32>
    %120 = vector.shape_cast %119 : vector<32x128xf32> to vector<4x8x128xf32>
    %121 = arith.truncf %120 : vector<4x8x128xf32> to vector<4x8x128xbf16>
    %c0_40 = arith.constant 0 : index
    %c0_41 = arith.constant 0 : index
    %c0_42 = arith.constant 0 : index
    %122 = vector.load %arg8[%c0_40, %c0_41, %c0_42] : memref<4x8x128xbf16, #tpu.memory_space<vmem>>, vector<4x8x128xbf16>
    tpu.vector_store %arg8[%c0_40, %c0_41, %c0_42], %121 {strides = array<i32>} : memref<4x8x128xbf16, #tpu.memory_space<vmem>>, vector<4x8x128xbf16>,
    return
  }
  func.func @transform_0(%arg0: i32) -> (i32, i32, i32) {
    %c0_i32 = arith.constant 0 : i32
    %c0_i32_0 = arith.constant 0 : i32
    %c0_i32_1 = arith.constant 0 : i32
    return %arg0, %c0_i32, %c0_i32_0 : i32, i32, i32
  }
  func.func @transform_1(%arg0: i32) -> (i32, i32) {
    %c0_i32 = arith.constant 0 : i32
    %c0_i32_0 = arith.constant 0 : i32
    %c0_i32_1 = arith.constant 0 : i32
    return %c0_i32, %c0_i32_0 : i32, i32
  }
  func.func @transform_2(%arg0: i32) -> (i32, i32) {
    %c0_i32 = arith.constant 0 : i32
    %c0_i32_0 = arith.constant 0 : i32
    %c0_i32_1 = arith.constant 0 : i32
    return %c0_i32, %c0_i32_0 : i32, i32
  }
  func.func @transform_3(%arg0: i32) -> (i32, i32) {
    %c0_i32 = arith.constant 0 : i32
    %c0_i32_0 = arith.constant 0 : i32
    %c0_i32_1 = arith.constant 0 : i32
    return %c0_i32, %c0_i32_0 : i32, i32
  }
  func.func @transform_4(%arg0: i32) -> (i32, i32) {
    %c0_i32 = arith.constant 0 : i32
    %c0_i32_0 = arith.constant 0 : i32
    %c0_i32_1 = arith.constant 0 : i32
    return %c0_i32, %c0_i32_0 : i32, i32
  }
  func.func @transform_5(%arg0: i32) -> (i32, i32) {
    %c0_i32 = arith.constant 0 : i32
    %c0_i32_0 = arith.constant 0 : i32
    %c0_i32_1 = arith.constant 0 : i32
    return %c0_i32, %c0_i32_0 : i32, i32
  }
  func.func @transform_6(%arg0: i32) -> (i32, i32) {
    %c0_i32 = arith.constant 0 : i32
    %c0_i32_0 = arith.constant 0 : i32
    %c0_i32_1 = arith.constant 0 : i32
    return %c0_i32, %c0_i32_0 : i32, i32
  }
  func.func @transform_7(%arg0: i32) -> (i32, i32, i32) {
    %c0_i32 = arith.constant 0 : i32
    %c0_i32_0 = arith.constant 0 : i32
    %c0_i32_1 = arith.constant 0 : i32
    return %arg0, %c0_i32, %c0_i32_0 : i32, i32, i32
  }
}

</mosaic_0001>

<llo_original>
// kernel: tpu_custom_call.1
$region0: #{tpu_custom_call.1}
  #allocation0 [shape = 'u32[]', space=smem, size = 0x4, offset = 0x4, fixed_abs, tag = 'smem constant byte address 0x4 - core index']
  #allocation1 [shape = 'u32[144,128]{1,0:T(1,128)}', space=vmem, size = 0x12000, scoped, tag = 'internal scratch']
  %s0 = inlined_call_operand.hbm [shape: bf16[4,8,128], index: 0, kind: input, shape index: {}]
  %s1 = inlined_call_operand.hbm [shape: bf16[128,384], index: 1, kind: input, shape index: {}]
  %s2 = inlined_call_operand.hbm [shape: f32[1,384], index: 2, kind: input, shape index: {}]
  %s3 = inlined_call_operand.hbm [shape: bf16[128,128], index: 3, kind: input, shape index: {}]
  %s4 = inlined_call_operand.hbm [shape: f32[1,128], index: 4, kind: input, shape index: {}]
  %s5 = inlined_call_operand.hbm [shape: f32[1,128], index: 5, kind: input, shape index: {}]
  %s6 = inlined_call_operand.hbm [shape: f32[1,128], index: 6, kind: input, shape index: {}]
  %s7 = inlined_call_operand.hbm [shape: bf16[4,8,128], index: 7, kind: output, shape index: {}]
  %s8 = sld [smem:[#allocation0]]
  $region66: #{tpu_custom_call.1} parent=0
    _
  %s10 = ssub.s32 1, %s8
  %s11 = scalar_select 0, %s10, %s8
  $region1: #{tpu_custom_call.1} parent=0
    #allocation2 [shape = 'u8[8192]{0}', space=vmem, size = 0x2000, scoped, tag = 'input window, operand 0, single buffered']
    #allocation3 [shape = 's32[1]{0}', space=sflag, size = 0x4, scoped, tag = 'scoped memory for tpu_custom_call.1']
    #allocation4 [shape = 's32[1]{0}', space=sflag, size = 0x4, scoped, tag = 'scoped memory for tpu_custom_call.1']
    #allocation5 [shape = 'u8[98304]{0}', space=vmem, size = 0x18000, scoped, tag = 'input window, operand 1, single buffered']
    #allocation6 [shape = 's32[1]{0}', space=sflag, size = 0x4, scoped, tag = 'scoped memory for tpu_custom_call.1']
    #allocation7 [shape = 'u8[1536]{0}', space=vmem, size = 0x800, scoped, tag = 'input window, operand 2, single buffered']
    #allocation8 [shape = 'u8[32768]{0}', space=vmem, size = 0x8000, scoped, tag = 'input window, operand 3, single buffered']
    #allocation9 [shape = 's32[1]{0}', space=sflag, size = 0x4, scoped, tag = 'scoped memory for tpu_custom_call.1']
    #allocation10 [shape = 'u8[512]{0}', space=vmem, size = 0x400, scoped, tag = 'input window, operand 4, single buffered']
    #allocation11 [shape = 'u8[512]{0}', space=vmem, size = 0x400, scoped, tag = 'input window, operand 5, single buffered']
    #allocation12 [shape = 's32[1]{0}', space=sflag, size = 0x4, scoped, tag = 'scoped memory for tpu_custom_call.1']
    #allocation13 [shape = 'u8[512]{0}', space=vmem, size = 0x400, scoped, tag = 'input window, operand 6, single buffered']
    #allocation14 [shape = 'u8[8192]{0}', space=vmem, size = 0x2000, scoped, tag = 'output window, operand 0, single buffered']
    %12 = vsyncpa [#allocation3], 0
    %13 = vsyncpa [#allocation6], 0
    %14 = vsyncpa [#allocation9], 0
    %15 = vsyncpa [#allocation12], 0
    %16 = vsyncpa [#allocation4], 0
    // Predicated region
    $region2: #{tpu_custom_call.1} parent=1 // pred_check
      _
    $region3: #{tpu_custom_call.1} parent=1 // pred_check_branch
      %18 = sbr.rel (0) target = $region5
    $region4: #{tpu_custom_call.1} parent=1 // pred_region
      %s20 = ssub.s32 256, 256
      %21 = vsyncadd [#allocation3], %s20
      %s22 = sshll.u32 [#allocation2], 4
      %s23 = int_to_ptr.vmem [resolvable:$true] %s22
      %28 = dma.hbm_to_vmem [thread:$0]  %s0, 256, %s23, [#allocation3], 64, 64, 4
    $region5: #{tpu_custom_call.1} parent=1 // pred_fallthru
      _
    // Predicated region
    $region6: #{tpu_custom_call.1} parent=1 // pred_check
      _
    $region7: #{tpu_custom_call.1} parent=1 // pred_check_branch
      %30 = sbr.rel (0) target = $region9
    $region8: #{tpu_custom_call.1} parent=1 // pred_region
      %s32 = ssub.s32 3072, 3072
      %33 = vsyncadd [#allocation6], %s32
      %s34 = sshll.u32 [#allocation5], 4
      %s35 = int_to_ptr.vmem [resolvable:$true] %s34
      %40 = dma.hbm_to_vmem [thread:$0]  %s1, 3072, %s35, [#allocation6], 192, 192, 12
    $region9: #{tpu_custom_call.1} parent=1 // pred_fallthru
      _
    // Predicated region
    $region10: #{tpu_custom_call.1} parent=1 // pred_check
      _
    $region11: #{tpu_custom_call.1} parent=1 // pred_check_branch
      %42 = sbr.rel (0) target = $region13
    $region12: #{tpu_custom_call.1} parent=1 // pred_region
      %s44 = ssub.s32 48, 48
      %45 = vsyncadd [#allocation6], %s44
      %s47 = sshll.u32 [#allocation7], 4
      %s48 = int_to_ptr.vmem [resolvable:$true] %s47
      %50 = dma.hbm_to_vmem [thread:$0]  %s2, 48, %s48, [#allocation6]
    $region13: #{tpu_custom_call.1} parent=1 // pred_fallthru
      _
    // Predicated region
    $region14: #{tpu_custom_call.1} parent=1 // pred_check
      _
    $region15: #{tpu_custom_call.1} parent=1 // pred_check_branch
      %52 = sbr.rel (0) target = $region17
    $region16: #{tpu_custom_call.1} parent=1 // pred_region
      %s54 = ssub.s32 1024, 1024
      %55 = vsyncadd [#allocation9], %s54
      %s56 = sshll.u32 [#allocation8], 4
      %s57 = int_to_ptr.vmem [resolvable:$true] %s56
      %62 = dma.hbm_to_vmem [thread:$0]  %s3, 1024, %s57, [#allocation9], 64, 64, 4
    $region17: #{tpu_custom_call.1} parent=1 // pred_fallthru
      _
    // Predicated region
    $region18: #{tpu_custom_call.1} parent=1 // pred_check
      _
    $region19: #{tpu_custom_call.1} parent=1 // pred_check_branch
      %64 = sbr.rel (0) target = $region21
    $region20: #{tpu_custom_call.1} parent=1 // pred_region
      %s66 = ssub.s32 16, 16
      %67 = vsyncadd [#allocation9], %s66
      %s69 = sshll.u32 [#allocation10], 4
      %s70 = int_to_ptr.vmem [resolvable:$true] %s69
      %72 = dma.hbm_to_vmem [thread:$0]  %s4, 16, %s70, [#allocation9]
    $region21: #{tpu_custom_call.1} parent=1 // pred_fallthru
      _
    // Predicated region
    $region22: #{tpu_custom_call.1} parent=1 // pred_check
      _
    $region23: #{tpu_custom_call.1} parent=1 // pred_check_branch
      %74 = sbr.rel (0) target = $region25
    $region24: #{tpu_custom_call.1} parent=1 // pred_region
      %s76 = ssub.s32 16, 16
      %77 = vsyncadd [#allocation12], %s76
      %s79 = sshll.u32 [#allocation11], 4
      %s80 = int_to_ptr.vmem [resolvable:$true] %s79
      %82 = dma.hbm_to_vmem [thread:$0]  %s5, 16, %s80, [#allocation12]
    $region25: #{tpu_custom_call.1} parent=1 // pred_fallthru
      _
    // Predicated region
    $region26: #{tpu_custom_call.1} parent=1 // pred_check
      _
    $region27: #{tpu_custom_call.1} parent=1 // pred_check_branch
      %84 = sbr.rel (0) target = $region29
    $region28: #{tpu_custom_call.1} parent=1 // pred_region
      %s86 = ssub.s32 16, 16
      %87 = vsyncadd [#allocation12], %s86
      %s89 = sshll.u32 [#allocation13], 4
      %s90 = int_to_ptr.vmem [resolvable:$true] %s89
      %92 = dma.hbm_to_vmem [thread:$0]  %s6, 16, %s90, [#allocation12]
    $region29: #{tpu_custom_call.1} parent=1 // pred_fallthru
      _
    // Predicated region
    $region30: #{tpu_custom_call.1} parent=1 // pred_check
      _
    $region31: #{tpu_custom_call.1} parent=1 // pred_check_branch
      %94 = sbr.rel (0) target = $region33
    $region32: #{tpu_custom_call.1} parent=1 // pred_region
      %95 = dma.done [#allocation3], 256
    $region33: #{tpu_custom_call.1} parent=1 // pred_fallthru
      _
    // Predicated region
    $region34: #{tpu_custom_call.1} parent=1 // pred_check
      _
    $region35: #{tpu_custom_call.1} parent=1 // pred_check_branch
      %97 = sbr.rel (0) target = $region37
    $region36: #{tpu_custom_call.1} parent=1 // pred_region
      %98 = dma.done [#allocation6], 3072
    $region37: #{tpu_custom_call.1} parent=1 // pred_fallthru
      _
    // Predicated region
    $region38: #{tpu_custom_call.1} parent=1 // pred_check
      _
    $region39: #{tpu_custom_call.1} parent=1 // pred_check_branch
      %100 = sbr.rel (0) target = $region41
    $region40: #{tpu_custom_call.1} parent=1 // pred_region
      %101 = dma.done [#allocation6], 48
    $region41: #{tpu_custom_call.1} parent=1 // pred_fallthru
      _
    // Predicated region
    $region42: #{tpu_custom_call.1} parent=1 // pred_check
      _
    $region43: #{tpu_custom_call.1} parent=1 // pred_check_branch
      %103 = sbr.rel (0) target = $region45
    $region44: #{tpu_custom_call.1} parent=1 // pred_region
      %104 = dma.done [#allocation9], 1024
    $region45: #{tpu_custom_call.1} parent=1 // pred_fallthru
      _
    // Predicated region
    $region46: #{tpu_custom_call.1} parent=1 // pred_check
      _
    $region47: #{tpu_custom_call.1} parent=1 // pred_check_branch
      %106 = sbr.rel (0) target = $region49
    $region48: #{tpu_custom_call.1} parent=1 // pred_region
      %107 = dma.done [#allocation9], 16
    $region49: #{tpu_custom_call.1} parent=1 // pred_fallthru
      _
    // Predicated region
    $region50: #{tpu_custom_call.1} parent=1 // pred_check
      _
    $region51: #{tpu_custom_call.1} parent=1 // pred_check_branch
      %109 = sbr.rel (0) target = $region53
    $region52: #{tpu_custom_call.1} parent=1 // pred_region
      %110 = dma.done [#allocation12], 16
    $region53: #{tpu_custom_call.1} parent=1 // pred_fallthru
      _
    // Predicated region
    $region54: #{tpu_custom_call.1} parent=1 // pred_check
      _
    $region55: #{tpu_custom_call.1} parent=1 // pred_check_branch
      %112 = sbr.rel (0) target = $region57
    $region56: #{tpu_custom_call.1} parent=1 // pred_region
      %113 = dma.done [#allocation12], 16
    $region57: #{tpu_custom_call.1} parent=1 // pred_fallthru
      _
    %v115 = vld [vmem:[#allocation2] sm:$0xf]
    %v116 = vld [vmem:[#allocation2 + $0x4] sm:$0xf]
    %v117 = vld [vmem:[#allocation2 + $0x8] sm:$0xf]
    %v118 = vld [vmem:[#allocation2 + $0xc] sm:$0xf]
    %v119 = vld [vmem:[#allocation5] sm:$0xff]
    %v120 = vld [vmem:[#allocation5 + $0x8] sm:$0xf]
    %v121 = vld [vmem:[#allocation5 + $0xc] sm:$0xff]
    %v122 = vld [vmem:[#allocation5 + $0x14] sm:$0xf]
    %v123 = vld [vmem:[#allocation5 + $0x18] sm:$0xff]
    %v124 = vld [vmem:[#allocation5 + $0x20] sm:$0xf]
    %v125 = vld [vmem:[#allocation5 + $0x24] sm:$0xff]
    %v126 = vld [vmem:[#allocation5 + $0x2c] sm:$0xf]
    %v127 = vld [vmem:[#allocation5 + $0x30] sm:$0xff]
    %v128 = vld [vmem:[#allocation5 + $0x38] sm:$0xf]
    %v129 = vld [vmem:[#allocation5 + $0x3c] sm:$0xff]
    %v130 = vld [vmem:[#allocation5 + $0x44] sm:$0xf]
    %v131 = vld [vmem:[#allocation5 + $0x48] sm:$0xff]
    %v132 = vld [vmem:[#allocation5 + $0x50] sm:$0xf]
    %v133 = vld [vmem:[#allocation5 + $0x54] sm:$0xff]
    %v134 = vld [vmem:[#allocation5 + $0x5c] sm:$0xf]
    %v135 = vld [vmem:[#allocation5 + $0x60] sm:$0xff]
    %v136 = vld [vmem:[#allocation5 + $0x68] sm:$0xf]
    %v137 = vld [vmem:[#allocation5 + $0x6c] sm:$0xff]
    %v138 = vld [vmem:[#allocation5 + $0x74] sm:$0xf]
    %v139 = vld [vmem:[#allocation5 + $0x78] sm:$0xff]
    %v140 = vld [vmem:[#allocation5 + $0x80] sm:$0xf]
    %v141 = vld [vmem:[#allocation5 + $0x84] sm:$0xff]
    %v142 = vld [vmem:[#allocation5 + $0x8c] sm:$0xf]
    %v143 = vld [vmem:[#allocation5 + $0x90] sm:$0xff]
    %v144 = vld [vmem:[#allocation5 + $0x98] sm:$0xf]
    %v145 = vld [vmem:[#allocation5 + $0x9c] sm:$0xff]
    %v146 = vld [vmem:[#allocation5 + $0xa4] sm:$0xf]
    %v147 = vld [vmem:[#allocation5 + $0xa8] sm:$0xff]
    %v148 = vld [vmem:[#allocation5 + $0xb0] sm:$0xf]
    %v149 = vld [vmem:[#allocation5 + $0xb4] sm:$0xff]
    %v150 = vld [vmem:[#allocation5 + $0xbc] sm:$0xf]
    %v151 = vld [vmem:[#allocation7] sm:$0x7]
    %v153 = vlaneseq
    %v154 = vshrl.u32 %v153, 7
    %v155 = vsub.s32 0, %v154
    %v156 = vrot.slane %v151, %v155
    %v157 = vlaneseq
    %v158 = vshrl.u32 %v157, 7
    %v159 = vsub.s32 1, %v158
    %v160 = vrot.slane %v151, %v159
    %v161 = vlaneseq
    %v162 = vshrl.u32 %v161, 7
    %v163 = vsub.s32 2, %v162
    %v164 = vrot.slane %v151, %v163
    %v172 = vunpack.c.l.b16 %v115
    %v173 = vunpack.c.l.b16 %v116
    %v174 = vunpack.c.l.b16 %v117
    %v175 = vunpack.c.l.b16 %v118
    %v176 = vpack.c.b16 %v173, %v172
    %v177 = vpack.c.b16 %v175, %v174
    %v212 = vunpack.c.l.b16 %v119
    %v213 = vunpack.c.h.b16 %v119
    %v214 = vunpack.c.l.b16 %v120
    %v215 = vunpack.c.l.b16 %v121
    %v216 = vunpack.c.h.b16 %v121
    %v217 = vunpack.c.l.b16 %v122
    %v218 = vunpack.c.l.b16 %v123
    %v219 = vunpack.c.h.b16 %v123
    %v220 = vunpack.c.l.b16 %v124
    %v221 = vunpack.c.l.b16 %v125
    %v222 = vunpack.c.h.b16 %v125
    %v223 = vunpack.c.l.b16 %v126
    %v224 = vunpack.c.l.b16 %v127
    %v225 = vunpack.c.h.b16 %v127
    %v226 = vunpack.c.l.b16 %v128
    %v227 = vunpack.c.l.b16 %v129
    %v228 = vunpack.c.h.b16 %v129
    %v229 = vunpack.c.l.b16 %v130
    %v230 = vunpack.c.l.b16 %v131
    %v231 = vunpack.c.h.b16 %v131
    %v232 = vunpack.c.l.b16 %v132
    %v233 = vunpack.c.l.b16 %v133
    %v234 = vunpack.c.h.b16 %v133
    %v235 = vunpack.c.l.b16 %v134
    %v236 = vunpack.c.l.b16 %v135
    %v237 = vunpack.c.h.b16 %v135
    %v238 = vunpack.c.l.b16 %v136
    %v239 = vunpack.c.l.b16 %v137
    %v240 = vunpack.c.h.b16 %v137
    %v241 = vunpack.c.l.b16 %v138
    %v242 = vunpack.c.l.b16 %v139
    %v243 = vunpack.c.h.b16 %v139
    %v244 = vunpack.c.l.b16 %v140
    %v245 = vunpack.c.l.b16 %v141
    %v246 = vunpack.c.h.b16 %v141
    %v247 = vunpack.c.l.b16 %v142
    %v248 = vunpack.c.l.b16 %v143
    %v249 = vunpack.c.h.b16 %v143
    %v250 = vunpack.c.l.b16 %v144
    %v251 = vunpack.c.l.b16 %v145
    %v252 = vunpack.c.h.b16 %v145
    %v253 = vunpack.c.l.b16 %v146
    %v254 = vunpack.c.l.b16 %v147
    %v255 = vunpack.c.h.b16 %v147
    %v256 = vunpack.c.l.b16 %v148
    %v257 = vunpack.c.l.b16 %v149
    %v258 = vunpack.c.h.b16 %v149
    %v259 = vunpack.c.l.b16 %v150
    %v260 = vpack.c.b16 %v215, %v212
    %v261 = vpack.c.b16 %v216, %v213
    %v262 = vpack.c.b16 %v217, %v214
    %v263 = vpack.c.b16 %v221, %v218
    %v264 = vpack.c.b16 %v222, %v219
    %v265 = vpack.c.b16 %v223, %v220
    %v266 = vpack.c.b16 %v227, %v224
    %v267 = vpack.c.b16 %v228, %v225
    %v268 = vpack.c.b16 %v229, %v226
    %v269 = vpack.c.b16 %v233, %v230
    %v270 = vpack.c.b16 %v234, %v231
    %v271 = vpack.c.b16 %v235, %v232
    %v272 = vpack.c.b16 %v239, %v236
    %v273 = vpack.c.b16 %v240, %v237
    %v274 = vpack.c.b16 %v241, %v238
    %v275 = vpack.c.b16 %v245, %v242
    %v276 = vpack.c.b16 %v246, %v243
    %v277 = vpack.c.b16 %v247, %v244
    %v278 = vpack.c.b16 %v251, %v248
    %v279 = vpack.c.b16 %v252, %v249
    %v280 = vpack.c.b16 %v253, %v250
    %v281 = vpack.c.b16 %v257, %v254
    %v282 = vpack.c.b16 %v258, %v255
    %v283 = vpack.c.b16 %v259, %v256
    %308 = vmatprep.subr.bf16.mxu0 %v261
    %309 = vmatpush1.bf16.msra.mxu0 %v260
    %310 = vmatprep.subr.bf16.mxu0 %v264
    %311 = vmatpush1.bf16.msra.mxu0 %v263
    %312 = vmatprep.subr.bf16.mxu0 %v267
    %313 = vmatpush1.bf16.msra.mxu0 %v266
    %314 = vmatprep.subr.bf16.mxu0 %v270
    %315 = vmatpush1.bf16.msra.mxu0 %v269
    %316 = vmatprep.subr.bf16.mxu0 %v273
    %317 = vmatpush1.bf16.msra.mxu0 %v272
    %318 = vmatprep.subr.bf16.mxu0 %v276
    %319 = vmatpush1.bf16.msra.mxu0 %v275
    %320 = vmatprep.subr.bf16.mxu0 %v279
    %321 = vmatpush1.bf16.msra.mxu0 %v278
    %322 = vmatprep.subr.bf16.mxu0 %v282
    %323 = vmatpush1.bf16.msra.mxu0 %v281
    %324 = vmatprep.subr.bf16.mxu0 0
    %325 = vmatpush1.bf16.msra.mxu0 0
    %326 = vmatprep.subr.bf16.mxu0 0
    %327 = vmatpush1.bf16.msra.mxu0 0
    %328 = vmatprep.subr.bf16.mxu0 0
    %329 = vmatpush1.bf16.msra.mxu0 0
    %330 = vmatprep.subr.bf16.mxu0 0
    %331 = vmatpush1.bf16.msra.mxu0 0
    %332 = vmatprep.subr.bf16.mxu0 0
    %333 = vmatpush1.bf16.msra.mxu0 0
    %334 = vmatprep.subr.bf16.mxu0 0
    %335 = vmatpush1.bf16.msra.mxu0 0
    %336 = vmatprep.subr.bf16.mxu0 0
    %337 = vmatpush1.bf16.msra.mxu0 0
    %338 = vmatprep.subr.bf16.mxu0 0
    %339 = vmatpush1.bf16.msra.mxu0 0
    %340 = vmatprep.mubr.bf16.mxu0 0
    %341 = vmatmul.mubr.bf16.gmra.mrb[0].mxu0 %v176
    %v342 = vpop.f32.mrb[0].mxu0
    %v343 = vadd.f32 %v156, %v342
    %v344 = vpop.f32.mrb[0].mxu0
    %v345 = vadd.f32 %v160, %v344
    %v346 = vpop.f32.mrb[0].mxu0
    %v347 = vadd.f32 %v156, %v346
    %v348 = vpop.f32.mrb[0].mxu0
    %v349 = vadd.f32 %v160, %v348
    %350 = vmatprep.mubr.bf16.mxu0 0
    %351 = vmatmul.mubr.bf16.gmra.mrb[0].mxu0 %v177
    %v352 = vpop.f32.mrb[0].mxu0
    %v353 = vadd.f32 %v156, %v352
    %v354 = vpop.f32.mrb[0].mxu0
    %v355 = vadd.f32 %v160, %v354
    %v356 = vpop.f32.mrb[0].mxu0
    %v357 = vadd.f32 %v156, %v356
    %v358 = vpop.f32.mrb[0].mxu0
    %v359 = vadd.f32 %v160, %v358
    %360 = vdwg.mxu0
    %361 = vmatprep.subr.bf16.mxu0 0
    %362 = vmatpush1.bf16.msra.mxu0 %v262
    %363 = vmatprep.subr.bf16.mxu0 0
    %364 = vmatpush1.bf16.msra.mxu0 %v265
    %365 = vmatprep.subr.bf16.mxu0 0
    %366 = vmatpush1.bf16.msra.mxu0 %v268
    %367 = vmatprep.subr.bf16.mxu0 0
    %368 = vmatpush1.bf16.msra.mxu0 %v271
    %369 = vmatprep.subr.bf16.mxu0 0
    %370 = vmatpush1.bf16.msra.mxu0 %v274
    %371 = vmatprep.subr.bf16.mxu0 0
    %372 = vmatpush1.bf16.msra.mxu0 %v277
    %373 = vmatprep.subr.bf16.mxu0 0
    %374 = vmatpush1.bf16.msra.mxu0 %v280
    %375 = vmatprep.subr.bf16.mxu0 0
    %376 = vmatpush1.bf16.msra.mxu0 %v283
    %377 = vmatprep.subr.bf16.mxu0 0
    %378 = vmatpush1.bf16.msra.mxu0 0
    %379 = vmatprep.subr.bf16.mxu0 0
    %380 = vmatpush1.bf16.msra.mxu0 0
    %381 = vmatprep.subr.bf16.mxu0 0
    %382 = vmatpush1.bf16.msra.mxu0 0
    %383 = vmatprep.subr.bf16.mxu0 0
    %384 = vmatpush1.bf16.msra.mxu0 0
    %385 = vmatprep.subr.bf16.mxu0 0
    %386 = vmatpush1.bf16.msra.mxu0 0
    %387 = vmatprep.subr.bf16.mxu0 0
    %388 = vmatpush1.bf16.msra.mxu0 0
    %389 = vmatprep.subr.bf16.mxu0 0
    %390 = vmatpush1.bf16.msra.mxu0 0
    %391 = vmatprep.subr.bf16.mxu0 0
    %392 = vmatpush1.bf16.msra.mxu0 0
    %393 = vmatprep.mubr.bf16.mxu0 0
    %394 = vmatmul.mubr.bf16.gmra.mrb[0].mxu0 %v176
    %v395 = vpop.f32.mrb[0].mxu0
    %v396 = vadd.f32 %v164, %v395
    %v397 = vpop.f32.mrb[0].mxu0
    %v398 = vpop.f32.mrb[0].mxu0
    %v399 = vadd.f32 %v164, %v398
    %v400 = vpop.f32.mrb[0].mxu0
    %401 = vmatprep.mubr.bf16.mxu0 0
    %402 = vmatmul.mubr.bf16.gmra.mrb[0].mxu0 %v177
    %v403 = vpop.f32.mrb[0].mxu0
    %v404 = vadd.f32 %v164, %v403
    %v405 = vpop.f32.mrb[0].mxu0
    %v406 = vpop.f32.mrb[0].mxu0
    %v407 = vadd.f32 %v164, %v406
    %v408 = vpop.f32.mrb[0].mxu0
    %409 = vdwg.mxu0
    %v410 = vpack.c.bf16 %v347, %v343
    %v411 = vpack.c.bf16 %v357, %v353
    %v414 = vunpack.c.l.b16 %v410
    %v415 = vunpack.c.h.b16 %v410
    %v416 = vunpack.c.l.b16 %v411
    %v417 = vunpack.c.h.b16 %v411
    %v418 = vpack.c.b16 %v414, %v414
    %v419 = vpack.c.b16 %v415, %v415
    %v420 = vpack.c.b16 %v416, %v416
    %v421 = vpack.c.b16 %v417, %v417
    %v422 = vpack.c.bf16 %v349, %v345
    %v423 = vpack.c.bf16 %v359, %v355
    %v426 = vunpack.c.l.b16 %v422
    %v427 = vunpack.c.h.b16 %v422
    %v428 = vunpack.c.l.b16 %v423
    %v429 = vunpack.c.h.b16 %v423
    %v430 = vpack.c.b16 %v426, %v426
    %v431 = vpack.c.b16 %v427, %v427
    %v432 = vpack.c.b16 %v428, %v428
    %v433 = vpack.c.b16 %v429, %v429
    %v434 = vpack.c.bf16 %v399, %v396
    %v435 = vpack.c.bf16 %v407, %v404
    %v438 = vunpack.c.l.b16 %v434
    %v439 = vunpack.c.h.b16 %v434
    %v440 = vunpack.c.l.b16 %v435
    %v441 = vunpack.c.h.b16 %v435
    %v442 = vpack.c.b16 %v438, %v438
    %v443 = vpack.c.b16 %v439, %v439
    %v444 = vpack.c.b16 %v440, %v440
    %v445 = vpack.c.b16 %v441, %v441
    %vm446 = vcmask 261120
    %v448 = vsel %vm446, %v418, 0
    %v451 = vsel %vm446, %v430, 0
    %453 = vmatprep.subr.bf16.mxu0 0
    %454 = vmatpush1.bf16.xpose.msra.mxu0 %v451
    %455 = vmatprep.subr.bf16.mxu0 0
    %456 = vmatpush1.bf16.xpose.msra.mxu0 0
    %457 = vmatprep.subr.bf16.mxu0 0
    %458 = vmatpush1.bf16.xpose.msra.mxu0 0
    %459 = vmatprep.subr.bf16.mxu0 0
    %460 = vmatpush1.bf16.xpose.msra.mxu0 0
    %461 = vmatprep.subr.bf16.mxu0 0
    %462 = vmatpush1.bf16.xpose.msra.mxu0 0
    %463 = vmatprep.subr.bf16.mxu0 0
    %464 = vmatpush1.bf16.xpose.msra.mxu0 0
    %465 = vmatprep.subr.bf16.mxu0 0
    %466 = vmatpush1.bf16.xpose.msra.mxu0 0
    %467 = vmatprep.subr.bf16.mxu0 0
    %468 = vmatpush1.bf16.xpose.msra.mxu0 0
    %469 = vmatprep.subr.bf16.mxu0 0
    %470 = vmatpush1.bf16.xpose.msra.mxu0 0
    %471 = vmatprep.subr.bf16.mxu0 0
    %472 = vmatpush1.bf16.xpose.msra.mxu0 0
    %473 = vmatprep.subr.bf16.mxu0 0
    %474 = vmatpush1.bf16.xpose.msra.mxu0 0
    %475 = vmatprep.subr.bf16.mxu0 0
    %476 = vmatpush1.bf16.xpose.msra.mxu0 0
    %477 = vmatprep.subr.bf16.mxu0 0
    %478 = vmatpush1.bf16.xpose.msra.mxu0 0
    %479 = vmatprep.subr.bf16.mxu0 0
    %480 = vmatpush1.bf16.xpose.msra.mxu0 0
    %481 = vmatprep.subr.bf16.mxu0 0
    %482 = vmatpush1.bf16.xpose.msra.mxu0 0
    %483 = vmatprep.subr.bf16.mxu0 0
    %484 = vmatpush1.bf16.xpose.msra.mxu0 0
    %485 = vmatprep.mubr.bf16.mxu0 0
    %486 = vmatmul.mubr.bf16.gmra.mrb[0].mxu0 %v448
    %v487 = vpop.f32.mrb[0].mxu0
    %v488 = vadd.f32 0.0, %v487
    %v489 = vpop.f32.mrb[0].mxu0
    %v490 = vpop.f32.mrb[0].mxu0
    %v491 = vpop.f32.mrb[0].mxu0
    %492 = vdwg.mxu0
    %v494 = vsel %vm446, %v419, 0
    %v497 = vsel %vm446, %v431, 0
    %499 = vmatprep.subr.bf16.mxu0 0
    %500 = vmatpush1.bf16.xpose.msra.mxu0 %v497
    %501 = vmatprep.subr.bf16.mxu0 0
    %502 = vmatpush1.bf16.xpose.msra.mxu0 0
    %503 = vmatprep.subr.bf16.mxu0 0
    %504 = vmatpush1.bf16.xpose.msra.mxu0 0
    %505 = vmatprep.subr.bf16.mxu0 0
    %506 = vmatpush1.bf16.xpose.msra.mxu0 0
    %507 = vmatprep.subr.bf16.mxu0 0
    %508 = vmatpush1.bf16.xpose.msra.mxu0 0
    %509 = vmatprep.subr.bf16.mxu0 0
    %510 = vmatpush1.bf16.xpose.msra.mxu0 0
    %511 = vmatprep.subr.bf16.mxu0 0
    %512 = vmatpush1.bf16.xpose.msra.mxu0 0
    %513 = vmatprep.subr.bf16.mxu0 0
    %514 = vmatpush1.bf16.xpose.msra.mxu0 0
    %515 = vmatprep.subr.bf16.mxu0 0
    %516 = vmatpush1.bf16.xpose.msra.mxu0 0
    %517 = vmatprep.subr.bf16.mxu0 0
    %518 = vmatpush1.bf16.xpose.msra.mxu0 0
    %519 = vmatprep.subr.bf16.mxu0 0
    %520 = vmatpush1.bf16.xpose.msra.mxu0 0
    %521 = vmatprep.subr.bf16.mxu0 0
    %522 = vmatpush1.bf16.xpose.msra.mxu0 0
    %523 = vmatprep.subr.bf16.mxu0 0
    %524 = vmatpush1.bf16.xpose.msra.mxu0 0
    %525 = vmatprep.subr.bf16.mxu0 0
    %526 = vmatpush1.bf16.xpose.msra.mxu0 0
    %527 = vmatprep.subr.bf16.mxu0 0
    %528 = vmatpush1.bf16.xpose.msra.mxu0 0
    %529 = vmatprep.subr.bf16.mxu0 0
    %530 = vmatpush1.bf16.xpose.msra.mxu0 0
    %531 = vmatprep.mubr.bf16.mxu0 0
    %532 = vmatmul.mubr.bf16.gmra.mrb[0].mxu0 %v494
    %v533 = vpop.f32.mrb[0].mxu0
    %v534 = vadd.f32 0.0, %v533
    %v535 = vpop.f32.mrb[0].mxu0
    %v536 = vpop.f32.mrb[0].mxu0
    %v537 = vpop.f32.mrb[0].mxu0
    %538 = vdwg.mxu0
    %v540 = vsel %vm446, %v420, 0
    %v543 = vsel %vm446, %v432, 0
    %545 = vmatprep.subr.bf16.mxu0 0
    %546 = vmatpush1.bf16.xpose.msra.mxu0 %v543
    %547 = vmatprep.subr.bf16.mxu0 0
    %548 = vmatpush1.bf16.xpose.msra.mxu0 0
    %549 = vmatprep.subr.bf16.mxu0 0
    %550 = vmatpush1.bf16.xpose.msra.mxu0 0
    %551 = vmatprep.subr.bf16.mxu0 0
    %552 = vmatpush1.bf16.xpose.msra.mxu0 0
    %553 = vmatprep.subr.bf16.mxu0 0
    %554 = vmatpush1.bf16.xpose.msra.mxu0 0
    %555 = vmatprep.subr.bf16.mxu0 0
    %556 = vmatpush1.bf16.xpose.msra.mxu0 0
    %557 = vmatprep.subr.bf16.mxu0 0
    %558 = vmatpush1.bf16.xpose.msra.mxu0 0
    %559 = vmatprep.subr.bf16.mxu0 0
    %560 = vmatpush1.bf16.xpose.msra.mxu0 0
    %561 = vmatprep.subr.bf16.mxu0 0
    %562 = vmatpush1.bf16.xpose.msra.mxu0 0
    %563 = vmatprep.subr.bf16.mxu0 0
    %564 = vmatpush1.bf16.xpose.msra.mxu0 0
    %565 = vmatprep.subr.bf16.mxu0 0
    %566 = vmatpush1.bf16.xpose.msra.mxu0 0
    %567 = vmatprep.subr.bf16.mxu0 0
    %568 = vmatpush1.bf16.xpose.msra.mxu0 0
    %569 = vmatprep.subr.bf16.mxu0 0
    %570 = vmatpush1.bf16.xpose.msra.mxu0 0
    %571 = vmatprep.subr.bf16.mxu0 0
    %572 = vmatpush1.bf16.xpose.msra.mxu0 0
    %573 = vmatprep.subr.bf16.mxu0 0
    %574 = vmatpush1.bf16.xpose.msra.mxu0 0
    %575 = vmatprep.subr.bf16.mxu0 0
    %576 = vmatpush1.bf16.xpose.msra.mxu0 0
    %577 = vmatprep.mubr.bf16.mxu0 0
    %578 = vmatmul.mubr.bf16.gmra.mrb[0].mxu0 %v540
    %v579 = vpop.f32.mrb[0].mxu0
    %v580 = vadd.f32 0.0, %v579
    %v581 = vpop.f32.mrb[0].mxu0
    %v582 = vpop.f32.mrb[0].mxu0
    %v583 = vpop.f32.mrb[0].mxu0
    %584 = vdwg.mxu0
    %v586 = vsel %vm446, %v421, 0
    %v589 = vsel %vm446, %v433, 0
    %591 = vmatprep.subr.bf16.mxu0 0
    %592 = vmatpush1.bf16.xpose.msra.mxu0 %v589
    %593 = vmatprep.subr.bf16.mxu0 0
    %594 = vmatpush1.bf16.xpose.msra.mxu0 0
    %595 = vmatprep.subr.bf16.mxu0 0
    %596 = vmatpush1.bf16.xpose.msra.mxu0 0
    %597 = vmatprep.subr.bf16.mxu0 0
    %598 = vmatpush1.bf16.xpose.msra.mxu0 0
    %599 = vmatprep.subr.bf16.mxu0 0
    %600 = vmatpush1.bf16.xpose.msra.mxu0 0
    %601 = vmatprep.subr.bf16.mxu0 0
    %602 = vmatpush1.bf16.xpose.msra.mxu0 0
    %603 = vmatprep.subr.bf16.mxu0 0
    %604 = vmatpush1.bf16.xpose.msra.mxu0 0
    %605 = vmatprep.subr.bf16.mxu0 0
    %606 = vmatpush1.bf16.xpose.msra.mxu0 0
    %607 = vmatprep.subr.bf16.mxu0 0
    %608 = vmatpush1.bf16.xpose.msra.mxu0 0
    %609 = vmatprep.subr.bf16.mxu0 0
    %610 = vmatpush1.bf16.xpose.msra.mxu0 0
    %611 = vmatprep.subr.bf16.mxu0 0
    %612 = vmatpush1.bf16.xpose.msra.mxu0 0
    %613 = vmatprep.subr.bf16.mxu0 0
    %614 = vmatpush1.bf16.xpose.msra.mxu0 0
    %615 = vmatprep.subr.bf16.mxu0 0
    %616 = vmatpush1.bf16.xpose.msra.mxu0 0
    %617 = vmatprep.subr.bf16.mxu0 0
    %618 = vmatpush1.bf16.xpose.msra.mxu0 0
    %619 = vmatprep.subr.bf16.mxu0 0
    %620 = vmatpush1.bf16.xpose.msra.mxu0 0
    %621 = vmatprep.subr.bf16.mxu0 0
    %622 = vmatpush1.bf16.xpose.msra.mxu0 0
    %623 = vmatprep.mubr.bf16.mxu0 0
    %624 = vmatmul.mubr.bf16.gmra.mrb[0].mxu0 %v586
    %v625 = vpop.f32.mrb[0].mxu0
    %v626 = vadd.f32 0.0, %v625
    %v627 = vpop.f32.mrb[0].mxu0
    %v628 = vpop.f32.mrb[0].mxu0
    %v629 = vpop.f32.mrb[0].mxu0
    %630 = vdwg.mxu0
    %v631 = vmul.f32 %v488, 0.17677669
    %v632 = vmul.f32 %v534, 0.17677669
    %v633 = vmul.f32 %v580, 0.17677669
    %v634 = vmul.f32 %v626, 0.17677669
    %vm635 = vcmask 64512
    %v636 = vsel %vm635, %v631, -inf
    %637 = vmax.xlane.f32.xlu0 %v636
    %v638 = vpop.xlane.xlu0 %637
    %v639 = vsel %vm635, %v632, -inf
    %640 = vmax.xlane.f32.xlu0 %v639
    %v641 = vpop.xlane.xlu0 %640
    %v642 = vsel %vm635, %v633, -inf
    %643 = vmax.xlane.f32.xlu0 %v642
    %v644 = vpop.xlane.xlu0 %643
    %v645 = vsel %vm635, %v634, -inf
    %646 = vmax.xlane.f32.xlu0 %v645
    %v647 = vpop.xlane.xlu0 %646
    %v648 = vsub.f32 %v631, %v638
    %v649 = vsub.f32 %v632, %v641
    %v650 = vsub.f32 %v633, %v644
    %v651 = vsub.f32 %v634, %v647
    %v652 = vmul.f32 %v648, 1.442695
    %v653 = vpow.pop %v652
    %v654 = vmul.f32 %v649, 1.442695
    %v655 = vpow.pop %v654
    %v656 = vmul.f32 %v650, 1.442695
    %v657 = vpow.pop %v656
    %v658 = vmul.f32 %v651, 1.442695
    %v659 = vpow.pop %v658
    %v660 = vsel %vm635, %v653, 0.0
    %661 = vadd.xlane.f32.xlu0 %v660
    %v662 = vpop.xlane.xlu0 %661
    %v663 = vsel %vm635, %v655, 0.0
    %664 = vadd.xlane.f32.xlu0 %v663
    %v665 = vpop.xlane.xlu0 %664
    %v666 = vsel %vm635, %v657, 0.0
    %667 = vadd.xlane.f32.xlu0 %v666
    %v668 = vpop.xlane.xlu0 %667
    %v669 = vsel %vm635, %v659, 0.0
    %670 = vadd.xlane.f32.xlu0 %v669
    %v671 = vpop.xlane.xlu0 %670
    %v672 = vrcp.pop %v662
    %v673 = vrcp.pop %v665
    %v674 = vrcp.pop %v668
    %v675 = vrcp.pop %v671
    %v676 = vmul.f32 %v653, %v672
    %v677 = vmul.f32 %v655, %v673
    %v678 = vmul.f32 %v657, %v674
    %v679 = vmul.f32 %v659, %v675
    %v680 = vpack.c.bf16 %v676, %v676
    %v681 = vpack.c.bf16 %v677, %v677
    %v682 = vpack.c.bf16 %v678, %v678
    %v683 = vpack.c.bf16 %v679, %v679
    %v685 = vsel %vm635, %v680, 0
    %vm687 = vcmask 1043456
    %v689 = vsel %vm687, %v442, 0
    %691 = vmatprep.subr.bf16.mxu0 0
    %692 = vmatpush1.bf16.msra.mxu0 %v689
    %693 = vmatprep.subr.bf16.mxu0 0
    %694 = vmatpush1.bf16.msra.mxu0 0
    %695 = vmatprep.subr.bf16.mxu0 0
    %696 = vmatpush1.bf16.msra.mxu0 0
    %697 = vmatprep.subr.bf16.mxu0 0
    %698 = vmatpush1.bf16.msra.mxu0 0
    %699 = vmatprep.subr.bf16.mxu0 0
    %700 = vmatpush1.bf16.msra.mxu0 0
    %701 = vmatprep.subr.bf16.mxu0 0
    %702 = vmatpush1.bf16.msra.mxu0 0
    %703 = vmatprep.subr.bf16.mxu0 0
    %704 = vmatpush1.bf16.msra.mxu0 0
    %705 = vmatprep.subr.bf16.mxu0 0
    %706 = vmatpush1.bf16.msra.mxu0 0
    %707 = vmatprep.subr.bf16.mxu0 0
    %708 = vmatpush1.bf16.msra.mxu0 0
    %709 = vmatprep.subr.bf16.mxu0 0
    %710 = vmatpush1.bf16.msra.mxu0 0
    %711 = vmatprep.subr.bf16.mxu0 0
    %712 = vmatpush1.bf16.msra.mxu0 0
    %713 = vmatprep.subr.bf16.mxu0 0
    %714 = vmatpush1.bf16.msra.mxu0 0
    %715 = vmatprep.subr.bf16.mxu0 0
    %716 = vmatpush1.bf16.msra.mxu0 0
    %717 = vmatprep.subr.bf16.mxu0 0
    %718 = vmatpush1.bf16.msra.mxu0 0
    %719 = vmatprep.subr.bf16.mxu0 0
    %720 = vmatpush1.bf16.msra.mxu0 0
    %721 = vmatprep.subr.bf16.mxu0 0
    %722 = vmatpush1.bf16.msra.mxu0 0
    %723 = vmatprep.mubr.bf16.mxu0 0
    %724 = vmatmul.mubr.bf16.gmra.mrb[0].mxu0 %v685
    %v725 = vpop.f32.mrb[0].mxu0
    %v726 = vadd.f32 0.0, %v725
    %v727 = vpop.f32.mrb[0].mxu0
    %v728 = vpop.f32.mrb[0].mxu0
    %v729 = vpop.f32.mrb[0].mxu0
    %730 = vdwg.mxu0
    %v732 = vsel %vm635, %v681, 0
    %v735 = vsel %vm687, %v443, 0
    %737 = vmatprep.subr.bf16.mxu0 0
    %738 = vmatpush1.bf16.msra.mxu0 %v735
    %739 = vmatprep.subr.bf16.mxu0 0
    %740 = vmatpush1.bf16.msra.mxu0 0
    %741 = vmatprep.subr.bf16.mxu0 0
    %742 = vmatpush1.bf16.msra.mxu0 0
    %743 = vmatprep.subr.bf16.mxu0 0
    %744 = vmatpush1.bf16.msra.mxu0 0
    %745 = vmatprep.subr.bf16.mxu0 0
    %746 = vmatpush1.bf16.msra.mxu0 0
    %747 = vmatprep.subr.bf16.mxu0 0
    %748 = vmatpush1.bf16.msra.mxu0 0
    %749 = vmatprep.subr.bf16.mxu0 0
    %750 = vmatpush1.bf16.msra.mxu0 0
    %751 = vmatprep.subr.bf16.mxu0 0
    %752 = vmatpush1.bf16.msra.mxu0 0
    %753 = vmatprep.subr.bf16.mxu0 0
    %754 = vmatpush1.bf16.msra.mxu0 0
    %755 = vmatprep.subr.bf16.mxu0 0
    %756 = vmatpush1.bf16.msra.mxu0 0
    %757 = vmatprep.subr.bf16.mxu0 0
    %758 = vmatpush1.bf16.msra.mxu0 0
    %759 = vmatprep.subr.bf16.mxu0 0
    %760 = vmatpush1.bf16.msra.mxu0 0
    %761 = vmatprep.subr.bf16.mxu0 0
    %762 = vmatpush1.bf16.msra.mxu0 0
    %763 = vmatprep.subr.bf16.mxu0 0
    %764 = vmatpush1.bf16.msra.mxu0 0
    %765 = vmatprep.subr.bf16.mxu0 0
    %766 = vmatpush1.bf16.msra.mxu0 0
    %767 = vmatprep.subr.bf16.mxu0 0
    %768 = vmatpush1.bf16.msra.mxu0 0
    %769 = vmatprep.mubr.bf16.mxu0 0
    %770 = vmatmul.mubr.bf16.gmra.mrb[0].mxu0 %v732
    %v771 = vpop.f32.mrb[0].mxu0
    %v772 = vadd.f32 0.0, %v771
    %v773 = vpop.f32.mrb[0].mxu0
    %v774 = vpop.f32.mrb[0].mxu0
    %v775 = vpop.f32.mrb[0].mxu0
    %776 = vdwg.mxu0
    %v778 = vsel %vm635, %v682, 0
    %v781 = vsel %vm687, %v444, 0
    %783 = vmatprep.subr.bf16.mxu0 0
    %784 = vmatpush1.bf16.msra.mxu0 %v781
    %785 = vmatprep.subr.bf16.mxu0 0
    %786 = vmatpush1.bf16.msra.mxu0 0
    %787 = vmatprep.subr.bf16.mxu0 0
    %788 = vmatpush1.bf16.msra.mxu0 0
    %789 = vmatprep.subr.bf16.mxu0 0
    %790 = vmatpush1.bf16.msra.mxu0 0
    %791 = vmatprep.subr.bf16.mxu0 0
    %792 = vmatpush1.bf16.msra.mxu0 0
    %793 = vmatprep.subr.bf16.mxu0 0
    %794 = vmatpush1.bf16.msra.mxu0 0
    %795 = vmatprep.subr.bf16.mxu0 0
    %796 = vmatpush1.bf16.msra.mxu0 0
    %797 = vmatprep.subr.bf16.mxu0 0
    %798 = vmatpush1.bf16.msra.mxu0 0
    %799 = vmatprep.subr.bf16.mxu0 0
    %800 = vmatpush1.bf16.msra.mxu0 0
    %801 = vmatprep.subr.bf16.mxu0 0
    %802 = vmatpush1.bf16.msra.mxu0 0
    %803 = vmatprep.subr.bf16.mxu0 0
    %804 = vmatpush1.bf16.msra.mxu0 0
    %805 = vmatprep.subr.bf16.mxu0 0
    %806 = vmatpush1.bf16.msra.mxu0 0
    %807 = vmatprep.subr.bf16.mxu0 0
    %808 = vmatpush1.bf16.msra.mxu0 0
    %809 = vmatprep.subr.bf16.mxu0 0
    %810 = vmatpush1.bf16.msra.mxu0 0
    %811 = vmatprep.subr.bf16.mxu0 0
    %812 = vmatpush1.bf16.msra.mxu0 0
    %813 = vmatprep.subr.bf16.mxu0 0
    %814 = vmatpush1.bf16.msra.mxu0 0
    %815 = vmatprep.mubr.bf16.mxu0 0
    %816 = vmatmul.mubr.bf16.gmra.mrb[0].mxu0 %v778
    %v817 = vpop.f32.mrb[0].mxu0
    %v818 = vadd.f32 0.0, %v817
    %v819 = vpop.f32.mrb[0].mxu0
    %v820 = vpop.f32.mrb[0].mxu0
    %v821 = vpop.f32.mrb[0].mxu0
    %822 = vdwg.mxu0
    %v824 = vsel %vm635, %v683, 0
    %v827 = vsel %vm687, %v445, 0
    %829 = vmatprep.subr.bf16.mxu0 0
    %830 = vmatpush1.bf16.msra.mxu0 %v827
    %831 = vmatprep.subr.bf16.mxu0 0
    %832 = vmatpush1.bf16.msra.mxu0 0
    %833 = vmatprep.subr.bf16.mxu0 0
    %834 = vmatpush1.bf16.msra.mxu0 0
    %835 = vmatprep.subr.bf16.mxu0 0
    %836 = vmatpush1.bf16.msra.mxu0 0
    %837 = vmatprep.subr.bf16.mxu0 0
    %838 = vmatpush1.bf16.msra.mxu0 0
    %839 = vmatprep.subr.bf16.mxu0 0
    %840 = vmatpush1.bf16.msra.mxu0 0
    %841 = vmatprep.subr.bf16.mxu0 0
    %842 = vmatpush1.bf16.msra.mxu0 0
    %843 = vmatprep.subr.bf16.mxu0 0
    %844 = vmatpush1.bf16.msra.mxu0 0
    %845 = vmatprep.subr.bf16.mxu0 0
    %846 = vmatpush1.bf16.msra.mxu0 0
    %847 = vmatprep.subr.bf16.mxu0 0
    %848 = vmatpush1.bf16.msra.mxu0 0
    %849 = vmatprep.subr.bf16.mxu0 0
    %850 = vmatpush1.bf16.msra.mxu0 0
    %851 = vmatprep.subr.bf16.mxu0 0
    %852 = vmatpush1.bf16.msra.mxu0 0
    %853 = vmatprep.subr.bf16.mxu0 0
    %854 = vmatpush1.bf16.msra.mxu0 0
    %855 = vmatprep.subr.bf16.mxu0 0
    %856 = vmatpush1.bf16.msra.mxu0 0
    %857 = vmatprep.subr.bf16.mxu0 0
    %858 = vmatpush1.bf16.msra.mxu0 0
    %859 = vmatprep.subr.bf16.mxu0 0
    %860 = vmatpush1.bf16.msra.mxu0 0
    %861 = vmatprep.mubr.bf16.mxu0 0
    %862 = vmatmul.mubr.bf16.gmra.mrb[0].mxu0 %v824
    %v863 = vpop.f32.mrb[0].mxu0
    %v864 = vadd.f32 0.0, %v863
    %v865 = vpop.f32.mrb[0].mxu0
    %v866 = vpop.f32.mrb[0].mxu0
    %v867 = vpop.f32.mrb[0].mxu0
    %868 = vdwg.mxu0
    %869 = vrot.lane.b32.xlu0 %v418, 96
    %v870 = vpop.permute.xlu0 %869
    %871 = vrot.lane.b32.xlu0 %v430, 96
    %v872 = vpop.permute.xlu0 %871
    %v874 = vsel %vm446, %v870, 0
    %v877 = vsel %vm446, %v872, 0
    %879 = vmatprep.subr.bf16.mxu0 0
    %880 = vmatpush1.bf16.xpose.msra.mxu0 %v877
    %881 = vmatprep.subr.bf16.mxu0 0
    %882 = vmatpush1.bf16.xpose.msra.mxu0 0
    %883 = vmatprep.subr.bf16.mxu0 0
    %884 = vmatpush1.bf16.xpose.msra.mxu0 0
    %885 = vmatprep.subr.bf16.mxu0 0
    %886 = vmatpush1.bf16.xpose.msra.mxu0 0
    %887 = vmatprep.subr.bf16.mxu0 0
    %888 = vmatpush1.bf16.xpose.msra.mxu0 0
    %889 = vmatprep.subr.bf16.mxu0 0
    %890 = vmatpush1.bf16.xpose.msra.mxu0 0
    %891 = vmatprep.subr.bf16.mxu0 0
    %892 = vmatpush1.bf16.xpose.msra.mxu0 0
    %893 = vmatprep.subr.bf16.mxu0 0
    %894 = vmatpush1.bf16.xpose.msra.mxu0 0
    %895 = vmatprep.subr.bf16.mxu0 0
    %896 = vmatpush1.bf16.xpose.msra.mxu0 0
    %897 = vmatprep.subr.bf16.mxu0 0
    %898 = vmatpush1.bf16.xpose.msra.mxu0 0
    %899 = vmatprep.subr.bf16.mxu0 0
    %900 = vmatpush1.bf16.xpose.msra.mxu0 0
    %901 = vmatprep.subr.bf16.mxu0 0
    %902 = vmatpush1.bf16.xpose.msra.mxu0 0
    %903 = vmatprep.subr.bf16.mxu0 0
    %904 = vmatpush1.bf16.xpose.msra.mxu0 0
    %905 = vmatprep.subr.bf16.mxu0 0
    %906 = vmatpush1.bf16.xpose.msra.mxu0 0
    %907 = vmatprep.subr.bf16.mxu0 0
    %908 = vmatpush1.bf16.xpose.msra.mxu0 0
    %909 = vmatprep.subr.bf16.mxu0 0
    %910 = vmatpush1.bf16.xpose.msra.mxu0 0
    %911 = vmatprep.mubr.bf16.mxu0 0
    %912 = vmatmul.mubr.bf16.gmra.mrb[0].mxu0 %v874
    %v913 = vpop.f32.mrb[0].mxu0
    %v914 = vadd.f32 0.0, %v913
    %v915 = vpop.f32.mrb[0].mxu0
    %v916 = vpop.f32.mrb[0].mxu0
    %v917 = vpop.f32.mrb[0].mxu0
    %918 = vdwg.mxu0
    %919 = vrot.lane.b32.xlu0 %v419, 96
    %v920 = vpop.permute.xlu0 %919
    %921 = vrot.lane.b32.xlu0 %v431, 96
    %v922 = vpop.permute.xlu0 %921
    %v924 = vsel %vm446, %v920, 0
    %v927 = vsel %vm446, %v922, 0
    %929 = vmatprep.subr.bf16.mxu0 0
    %930 = vmatpush1.bf16.xpose.msra.mxu0 %v927
    %931 = vmatprep.subr.bf16.mxu0 0
    %932 = vmatpush1.bf16.xpose.msra.mxu0 0
    %933 = vmatprep.subr.bf16.mxu0 0
    %934 = vmatpush1.bf16.xpose.msra.mxu0 0
    %935 = vmatprep.subr.bf16.mxu0 0
    %936 = vmatpush1.bf16.xpose.msra.mxu0 0
    %937 = vmatprep.subr.bf16.mxu0 0
    %938 = vmatpush1.bf16.xpose.msra.mxu0 0
    %939 = vmatprep.subr.bf16.mxu0 0
    %940 = vmatpush1.bf16.xpose.msra.mxu0 0
    %941 = vmatprep.subr.bf16.mxu0 0
    %942 = vmatpush1.bf16.xpose.msra.mxu0 0
    %943 = vmatprep.subr.bf16.mxu0 0
    %944 = vmatpush1.bf16.xpose.msra.mxu0 0
    %945 = vmatprep.subr.bf16.mxu0 0
    %946 = vmatpush1.bf16.xpose.msra.mxu0 0
    %947 = vmatprep.subr.bf16.mxu0 0
    %948 = vmatpush1.bf16.xpose.msra.mxu0 0
    %949 = vmatprep.subr.bf16.mxu0 0
    %950 = vmatpush1.bf16.xpose.msra.mxu0 0
    %951 = vmatprep.subr.bf16.mxu0 0
    %952 = vmatpush1.bf16.xpose.msra.mxu0 0
    %953 = vmatprep.subr.bf16.mxu0 0
    %954 = vmatpush1.bf16.xpose.msra.mxu0 0
    %955 = vmatprep.subr.bf16.mxu0 0
    %956 = vmatpush1.bf16.xpose.msra.mxu0 0
    %957 = vmatprep.subr.bf16.mxu0 0
    %958 = vmatpush1.bf16.xpose.msra.mxu0 0
    %959 = vmatprep.subr.bf16.mxu0 0
    %960 = vmatpush1.bf16.xpose.msra.mxu0 0
    %961 = vmatprep.mubr.bf16.mxu0 0
    %962 = vmatmul.mubr.bf16.gmra.mrb[0].mxu0 %v924
    %v963 = vpop.f32.mrb[0].mxu0
    %v964 = vadd.f32 0.0, %v963
    %v965 = vpop.f32.mrb[0].mxu0
    %v966 = vpop.f32.mrb[0].mxu0
    %v967 = vpop.f32.mrb[0].mxu0
    %968 = vdwg.mxu0
    %969 = vrot.lane.b32.xlu0 %v420, 96
    %v970 = vpop.permute.xlu0 %969
    %971 = vrot.lane.b32.xlu0 %v432, 96
    %v972 = vpop.permute.xlu0 %971
    %v974 = vsel %vm446, %v970, 0
    %v977 = vsel %vm446, %v972, 0
    %979 = vmatprep.subr.bf16.mxu0 0
    %980 = vmatpush1.bf16.xpose.msra.mxu0 %v977
    %981 = vmatprep.subr.bf16.mxu0 0
    %982 = vmatpush1.bf16.xpose.msra.mxu0 0
    %983 = vmatprep.subr.bf16.mxu0 0
    %984 = vmatpush1.bf16.xpose.msra.mxu0 0
    %985 = vmatprep.subr.bf16.mxu0 0
    %986 = vmatpush1.bf16.xpose.msra.mxu0 0
    %987 = vmatprep.subr.bf16.mxu0 0
    %988 = vmatpush1.bf16.xpose.msra.mxu0 0
    %989 = vmatprep.subr.bf16.mxu0 0
    %990 = vmatpush1.bf16.xpose.msra.mxu0 0
    %991 = vmatprep.subr.bf16.mxu0 0
    %992 = vmatpush1.bf16.xpose.msra.mxu0 0
    %993 = vmatprep.subr.bf16.mxu0 0
    %994 = vmatpush1.bf16.xpose.msra.mxu0 0
    %995 = vmatprep.subr.bf16.mxu0 0
    %996 = vmatpush1.bf16.xpose.msra.mxu0 0
    %997 = vmatprep.subr.bf16.mxu0 0
    %998 = vmatpush1.bf16.xpose.msra.mxu0 0
    %999 = vmatprep.subr.bf16.mxu0 0
    %1000 = vmatpush1.bf16.xpose.msra.mxu0 0
    %1001 = vmatprep.subr.bf16.mxu0 0
    %1002 = vmatpush1.bf16.xpose.msra.mxu0 0
    %1003 = vmatprep.subr.bf16.mxu0 0
    %1004 = vmatpush1.bf16.xpose.msra.mxu0 0
    %1005 = vmatprep.subr.bf16.mxu0 0
    %1006 = vmatpush1.bf16.xpose.msra.mxu0 0
    %1007 = vmatprep.subr.bf16.mxu0 0
    %1008 = vmatpush1.bf16.xpose.msra.mxu0 0
    %1009 = vmatprep.subr.bf16.mxu0 0
    %1010 = vmatpush1.bf16.xpose.msra.mxu0 0
    %1011 = vmatprep.mubr.bf16.mxu0 0
    %1012 = vmatmul.mubr.bf16.gmra.mrb[0].mxu0 %v974
    %v1013 = vpop.f32.mrb[0].mxu0
    %v1014 = vadd.f32 0.0, %v1013
    %v1015 = vpop.f32.mrb[0].mxu0
    %v1016 = vpop.f32.mrb[0].mxu0
    %v1017 = vpop.f32.mrb[0].mxu0
    %1018 = vdwg.mxu0
    %1019 = vrot.lane.b32.xlu0 %v421, 96
    %v1020 = vpop.permute.xlu0 %1019
    %1021 = vrot.lane.b32.xlu0 %v433, 96
    %v1022 = vpop.permute.xlu0 %1021
    %v1024 = vsel %vm446, %v1020, 0
    %v1027 = vsel %vm446, %v1022, 0
    %1029 = vmatprep.subr.bf16.mxu0 0
    %1030 = vmatpush1.bf16.xpose.msra.mxu0 %v1027
    %1031 = vmatprep.subr.bf16.mxu0 0
    %1032 = vmatpush1.bf16.xpose.msra.mxu0 0
    %1033 = vmatprep.subr.bf16.mxu0 0
    %1034 = vmatpush1.bf16.xpose.msra.mxu0 0
    %1035 = vmatprep.subr.bf16.mxu0 0
    %1036 = vmatpush1.bf16.xpose.msra.mxu0 0
    %1037 = vmatprep.subr.bf16.mxu0 0
    %1038 = vmatpush1.bf16.xpose.msra.mxu0 0
    %1039 = vmatprep.subr.bf16.mxu0 0
    %1040 = vmatpush1.bf16.xpose.msra.mxu0 0
    %1041 = vmatprep.subr.bf16.mxu0 0
    %1042 = vmatpush1.bf16.xpose.msra.mxu0 0
    %1043 = vmatprep.subr.bf16.mxu0 0
    %1044 = vmatpush1.bf16.xpose.msra.mxu0 0
    %1045 = vmatprep.subr.bf16.mxu0 0
    %1046 = vmatpush1.bf16.xpose.msra.mxu0 0
    %1047 = vmatprep.subr.bf16.mxu0 0
    %1048 = vmatpush1.bf16.xpose.msra.mxu0 0
    %1049 = vmatprep.subr.bf16.mxu0 0
    %1050 = vmatpush1.bf16.xpose.msra.mxu0 0
    %1051 = vmatprep.subr.bf16.mxu0 0
    %1052 = vmatpush1.bf16.xpose.msra.mxu0 0
    %1053 = vmatprep.subr.bf16.mxu0 0
    %1054 = vmatpush1.bf16.xpose.msra.mxu0 0
    %1055 = vmatprep.subr.bf16.mxu0 0
    %1056 = vmatpush1.bf16.xpose.msra.mxu0 0
    %1057 = vmatprep.subr.bf16.mxu0 0
    %1058 = vmatpush1.bf16.xpose.msra.mxu0 0
    %1059 = vmatprep.subr.bf16.mxu0 0
    %1060 = vmatpush1.bf16.xpose.msra.mxu0 0
    %1061 = vmatprep.mubr.bf16.mxu0 0
    %1062 = vmatmul.mubr.bf16.gmra.mrb[0].mxu0 %v1024
    %v1063 = vpop.f32.mrb[0].mxu0
    %v1064 = vadd.f32 0.0, %v1063
    %v1065 = vpop.f32.mrb[0].mxu0
    %v1066 = vpop.f32.mrb[0].mxu0
    %v1067 = vpop.f32.mrb[0].mxu0
    %1068 = vdwg.mxu0
    %v1069 = vmul.f32 %v914, 0.17677669
    %v1070 = vmul.f32 %v964, 0.17677669
    %v1071 = vmul.f32 %v1014, 0.17677669
    %v1072 = vmul.f32 %v1064, 0.17677669
    %v1073 = vsel %vm635, %v1069, -inf
    %1074 = vmax.xlane.f32.xlu0 %v1073
    %v1075 = vpop.xlane.xlu0 %1074
    %v1076 = vsel %vm635, %v1070, -inf
    %1077 = vmax.xlane.f32.xlu0 %v1076
    %v1078 = vpop.xlane.xlu0 %1077
    %v1079 = vsel %vm635, %v1071, -inf
    %1080 = vmax.xlane.f32.xlu0 %v1079
    %v1081 = vpop.xlane.xlu0 %1080
    %v1082 = vsel %vm635, %v1072, -inf
    %1083 = vmax.xlane.f32.xlu0 %v1082
    %v1084 = vpop.xlane.xlu0 %1083
    %v1085 = vsub.f32 %v1069, %v1075
    %v1086 = vsub.f32 %v1070, %v1078
    %v1087 = vsub.f32 %v1071, %v1081
    %v1088 = vsub.f32 %v1072, %v1084
    %v1089 = vmul.f32 %v1085, 1.442695
    %v1090 = vpow.pop %v1089
    %v1091 = vmul.f32 %v1086, 1.442695
    %v1092 = vpow.pop %v1091
    %v1093 = vmul.f32 %v1087, 1.442695
    %v1094 = vpow.pop %v1093
    %v1095 = vmul.f32 %v1088, 1.442695
    %v1096 = vpow.pop %v1095
    %v1097 = vsel %vm635, %v1090, 0.0
    %1098 = vadd.xlane.f32.xlu0 %v1097
    %v1099 = vpop.xlane.xlu0 %1098
    %v1100 = vsel %vm635, %v1092, 0.0
    %1101 = vadd.xlane.f32.xlu0 %v1100
    %v1102 = vpop.xlane.xlu0 %1101
    %v1103 = vsel %vm635, %v1094, 0.0
    %1104 = vadd.xlane.f32.xlu0 %v1103
    %v1105 = vpop.xlane.xlu0 %1104
    %v1106 = vsel %vm635, %v1096, 0.0
    %1107 = vadd.xlane.f32.xlu0 %v1106
    %v1108 = vpop.xlane.xlu0 %1107
    %v1109 = vrcp.pop %v1099
    %v1110 = vrcp.pop %v1102
    %v1111 = vrcp.pop %v1105
    %v1112 = vrcp.pop %v1108
    %v1113 = vmul.f32 %v1090, %v1109
    %v1114 = vmul.f32 %v1092, %v1110
    %v1115 = vmul.f32 %v1094, %v1111
    %v1116 = vmul.f32 %v1096, %v1112
    %v1117 = vpack.c.bf16 %v1113, %v1113
    %v1118 = vpack.c.bf16 %v1114, %v1114
    %v1119 = vpack.c.bf16 %v1115, %v1115
    %v1120 = vpack.c.bf16 %v1116, %v1116
    %1121 = vrot.lane.b32.xlu0 %v442, 96
    %v1122 = vpop.permute.xlu0 %1121
    %v1124 = vsel %vm635, %v1117, 0
    %v1127 = vsel %vm687, %v1122, 0
    %1129 = vmatprep.subr.bf16.mxu0 0
    %1130 = vmatpush1.bf16.msra.mxu0 %v1127
    %1131 = vmatprep.subr.bf16.mxu0 0
    %1132 = vmatpush1.bf16.msra.mxu0 0
    %1133 = vmatprep.subr.bf16.mxu0 0
    %1134 = vmatpush1.bf16.msra.mxu0 0
    %1135 = vmatprep.subr.bf16.mxu0 0
    %1136 = vmatpush1.bf16.msra.mxu0 0
    %1137 = vmatprep.subr.bf16.mxu0 0
    %1138 = vmatpush1.bf16.msra.mxu0 0
    %1139 = vmatprep.subr.bf16.mxu0 0
    %1140 = vmatpush1.bf16.msra.mxu0 0
    %1141 = vmatprep.subr.bf16.mxu0 0
    %1142 = vmatpush1.bf16.msra.mxu0 0
    %1143 = vmatprep.subr.bf16.mxu0 0
    %1144 = vmatpush1.bf16.msra.mxu0 0
    %1145 = vmatprep.subr.bf16.mxu0 0
    %1146 = vmatpush1.bf16.msra.mxu0 0
    %1147 = vmatprep.subr.bf16.mxu0 0
    %1148 = vmatpush1.bf16.msra.mxu0 0
    %1149 = vmatprep.subr.bf16.mxu0 0
    %1150 = vmatpush1.bf16.msra.mxu0 0
    %1151 = vmatprep.subr.bf16.mxu0 0
    %1152 = vmatpush1.bf16.msra.mxu0 0
    %1153 = vmatprep.subr.bf16.mxu0 0
    %1154 = vmatpush1.bf16.msra.mxu0 0
    %1155 = vmatprep.subr.bf16.mxu0 0
    %1156 = vmatpush1.bf16.msra.mxu0 0
    %1157 = vmatprep.subr.bf16.mxu0 0
    %1158 = vmatpush1.bf16.msra.mxu0 0
    %1159 = vmatprep.subr.bf16.mxu0 0
    %1160 = vmatpush1.bf16.msra.mxu0 0
    %1161 = vmatprep.mubr.bf16.mxu0 0
    %1162 = vmatmul.mubr.bf16.gmra.mrb[0].mxu0 %v1124
    %v1163 = vpop.f32.mrb[0].mxu0
    %v1164 = vadd.f32 0.0, %v1163
    %v1165 = vpop.f32.mrb[0].mxu0
    %v1166 = vpop.f32.mrb[0].mxu0
    %v1167 = vpop.f32.mrb[0].mxu0
    %1168 = vdwg.mxu0
    %1169 = vrot.lane.b32.xlu0 %v443, 96
    %v1170 = vpop.permute.xlu0 %1169
    %v1172 = vsel %vm635, %v1118, 0
    %v1175 = vsel %vm687, %v1170, 0
    %1177 = vmatprep.subr.bf16.mxu0 0
    %1178 = vmatpush1.bf16.msra.mxu0 %v1175
    %1179 = vmatprep.subr.bf16.mxu0 0
    %1180 = vmatpush1.bf16.msra.mxu0 0
    %1181 = vmatprep.subr.bf16.mxu0 0
    %1182 = vmatpush1.bf16.msra.mxu0 0
    %1183 = vmatprep.subr.bf16.mxu0 0
    %1184 = vmatpush1.bf16.msra.mxu0 0
    %1185 = vmatprep.subr.bf16.mxu0 0
    %1186 = vmatpush1.bf16.msra.mxu0 0
    %1187 = vmatprep.subr.bf16.mxu0 0
    %1188 = vmatpush1.bf16.msra.mxu0 0
    %1189 = vmatprep.subr.bf16.mxu0 0
    %1190 = vmatpush1.bf16.msra.mxu0 0
    %1191 = vmatprep.subr.bf16.mxu0 0
    %1192 = vmatpush1.bf16.msra.mxu0 0
    %1193 = vmatprep.subr.bf16.mxu0 0
    %1194 = vmatpush1.bf16.msra.mxu0 0
    %1195 = vmatprep.subr.bf16.mxu0 0
    %1196 = vmatpush1.bf16.msra.mxu0 0
    %1197 = vmatprep.subr.bf16.mxu0 0
    %1198 = vmatpush1.bf16.msra.mxu0 0
    %1199 = vmatprep.subr.bf16.mxu0 0
    %1200 = vmatpush1.bf16.msra.mxu0 0
    %1201 = vmatprep.subr.bf16.mxu0 0
    %1202 = vmatpush1.bf16.msra.mxu0 0
    %1203 = vmatprep.subr.bf16.mxu0 0
    %1204 = vmatpush1.bf16.msra.mxu0 0
    %1205 = vmatprep.subr.bf16.mxu0 0
    %1206 = vmatpush1.bf16.msra.mxu0 0
    %1207 = vmatprep.subr.bf16.mxu0 0
    %1208 = vmatpush1.bf16.msra.mxu0 0
    %1209 = vmatprep.mubr.bf16.mxu0 0
    %1210 = vmatmul.mubr.bf16.gmra.mrb[0].mxu0 %v1172
    %v1211 = vpop.f32.mrb[0].mxu0
    %v1212 = vadd.f32 0.0, %v1211
    %v1213 = vpop.f32.mrb[0].mxu0
    %v1214 = vpop.f32.mrb[0].mxu0
    %v1215 = vpop.f32.mrb[0].mxu0
    %1216 = vdwg.mxu0
    %1217 = vrot.lane.b32.xlu0 %v444, 96
    %v1218 = vpop.permute.xlu0 %1217
    %v1220 = vsel %vm635, %v1119, 0
    %v1223 = vsel %vm687, %v1218, 0
    %1225 = vmatprep.subr.bf16.mxu0 0
    %1226 = vmatpush1.bf16.msra.mxu0 %v1223
    %1227 = vmatprep.subr.bf16.mxu0 0
    %1228 = vmatpush1.bf16.msra.mxu0 0
    %1229 = vmatprep.subr.bf16.mxu0 0
    %1230 = vmatpush1.bf16.msra.mxu0 0
    %1231 = vmatprep.subr.bf16.mxu0 0
    %1232 = vmatpush1.bf16.msra.mxu0 0
    %1233 = vmatprep.subr.bf16.mxu0 0
    %1234 = vmatpush1.bf16.msra.mxu0 0
    %1235 = vmatprep.subr.bf16.mxu0 0
    %1236 = vmatpush1.bf16.msra.mxu0 0
    %1237 = vmatprep.subr.bf16.mxu0 0
    %1238 = vmatpush1.bf16.msra.mxu0 0
    %1239 = vmatprep.subr.bf16.mxu0 0
    %1240 = vmatpush1.bf16.msra.mxu0 0
    %1241 = vmatprep.subr.bf16.mxu0 0
    %1242 = vmatpush1.bf16.msra.mxu0 0
    %1243 = vmatprep.subr.bf16.mxu0 0
    %1244 = vmatpush1.bf16.msra.mxu0 0
    %1245 = vmatprep.subr.bf16.mxu0 0
    %1246 = vmatpush1.bf16.msra.mxu0 0
    %1247 = vmatprep.subr.bf16.mxu0 0
    %1248 = vmatpush1.bf16.msra.mxu0 0
    %1249 = vmatprep.subr.bf16.mxu0 0
    %1250 = vmatpush1.bf16.msra.mxu0 0
    %1251 = vmatprep.subr.bf16.mxu0 0
    %1252 = vmatpush1.bf16.msra.mxu0 0
    %1253 = vmatprep.subr.bf16.mxu0 0
    %1254 = vmatpush1.bf16.msra.mxu0 0
    %1255 = vmatprep.subr.bf16.mxu0 0
    %1256 = vmatpush1.bf16.msra.mxu0 0
    %1257 = vmatprep.mubr.bf16.mxu0 0
    %1258 = vmatmul.mubr.bf16.gmra.mrb[0].mxu0 %v1220
    %v1259 = vpop.f32.mrb[0].mxu0
    %v1260 = vadd.f32 0.0, %v1259
    %v1261 = vpop.f32.mrb[0].mxu0
    %v1262 = vpop.f32.mrb[0].mxu0
    %v1263 = vpop.f32.mrb[0].mxu0
    %1264 = vdwg.mxu0
    %1265 = vrot.lane.b32.xlu0 %v445, 96
    %v1266 = vpop.permute.xlu0 %1265
    %v1268 = vsel %vm635, %v1120, 0
    %v1271 = vsel %vm687, %v1266, 0
    %1273 = vmatprep.subr.bf16.mxu0 0
    %1274 = vmatpush1.bf16.msra.mxu0 %v1271
    %1275 = vmatprep.subr.bf16.mxu0 0
    %1276 = vmatpush1.bf16.msra.mxu0 0
    %1277 = vmatprep.subr.bf16.mxu0 0
    %1278 = vmatpush1.bf16.msra.mxu0 0
    %1279 = vmatprep.subr.bf16.mxu0 0
    %1280 = vmatpush1.bf16.msra.mxu0 0
    %1281 = vmatprep.subr.bf16.mxu0 0
    %1282 = vmatpush1.bf16.msra.mxu0 0
    %1283 = vmatprep.subr.bf16.mxu0 0
    %1284 = vmatpush1.bf16.msra.mxu0 0
    %1285 = vmatprep.subr.bf16.mxu0 0
    %1286 = vmatpush1.bf16.msra.mxu0 0
    %1287 = vmatprep.subr.bf16.mxu0 0
    %1288 = vmatpush1.bf16.msra.mxu0 0
    %1289 = vmatprep.subr.bf16.mxu0 0
    %1290 = vmatpush1.bf16.msra.mxu0 0
    %1291 = vmatprep.subr.bf16.mxu0 0
    %1292 = vmatpush1.bf16.msra.mxu0 0
    %1293 = vmatprep.subr.bf16.mxu0 0
    %1294 = vmatpush1.bf16.msra.mxu0 0
    %1295 = vmatprep.subr.bf16.mxu0 0
    %1296 = vmatpush1.bf16.msra.mxu0 0
    %1297 = vmatprep.subr.bf16.mxu0 0
    %1298 = vmatpush1.bf16.msra.mxu0 0
    %1299 = vmatprep.subr.bf16.mxu0 0
    %1300 = vmatpush1.bf16.msra.mxu0 0
    %1301 = vmatprep.subr.bf16.mxu0 0
    %1302 = vmatpush1.bf16.msra.mxu0 0
    %1303 = vmatprep.subr.bf16.mxu0 0
    %1304 = vmatpush1.bf16.msra.mxu0 0
    %1305 = vmatprep.mubr.bf16.mxu0 0
    %1306 = vmatmul.mubr.bf16.gmra.mrb[0].mxu0 %v1268
    %v1307 = vpop.f32.mrb[0].mxu0
    %v1308 = vadd.f32 0.0, %v1307
    %v1309 = vpop.f32.mrb[0].mxu0
    %v1310 = vpop.f32.mrb[0].mxu0
    %v1311 = vpop.f32.mrb[0].mxu0
    %1312 = vdwg.mxu0
    %1313 = vrot.lane.b32.xlu0 %v418, 64
    %v1314 = vpop.permute.xlu0 %1313
    %1315 = vrot.lane.b32.xlu0 %v430, 64
    %v1316 = vpop.permute.xlu0 %1315
    %v1318 = vsel %vm446, %v1314, 0
    %v1321 = vsel %vm446, %v1316, 0
    %1323 = vmatprep.subr.bf16.mxu0 0
    %1324 = vmatpush1.bf16.xpose.msra.mxu0 %v1321
    %1325 = vmatprep.subr.bf16.mxu0 0
    %1326 = vmatpush1.bf16.xpose.msra.mxu0 0
    %1327 = vmatprep.subr.bf16.mxu0 0
    %1328 = vmatpush1.bf16.xpose.msra.mxu0 0
    %1329 = vmatprep.subr.bf16.mxu0 0
    %1330 = vmatpush1.bf16.xpose.msra.mxu0 0
    %1331 = vmatprep.subr.bf16.mxu0 0
    %1332 = vmatpush1.bf16.xpose.msra.mxu0 0
    %1333 = vmatprep.subr.bf16.mxu0 0
    %1334 = vmatpush1.bf16.xpose.msra.mxu0 0
    %1335 = vmatprep.subr.bf16.mxu0 0
    %1336 = vmatpush1.bf16.xpose.msra.mxu0 0
    %1337 = vmatprep.subr.bf16.mxu0 0
    %1338 = vmatpush1.bf16.xpose.msra.mxu0 0
    %1339 = vmatprep.subr.bf16.mxu0 0
    %1340 = vmatpush1.bf16.xpose.msra.mxu0 0
    %1341 = vmatprep.subr.bf16.mxu0 0
    %1342 = vmatpush1.bf16.xpose.msra.mxu0 0
    %1343 = vmatprep.subr.bf16.mxu0 0
    %1344 = vmatpush1.bf16.xpose.msra.mxu0 0
    %1345 = vmatprep.subr.bf16.mxu0 0
    %1346 = vmatpush1.bf16.xpose.msra.mxu0 0
    %1347 = vmatprep.subr.bf16.mxu0 0
    %1348 = vmatpush1.bf16.xpose.msra.mxu0 0
    %1349 = vmatprep.subr.bf16.mxu0 0
    %1350 = vmatpush1.bf16.xpose.msra.mxu0 0
    %1351 = vmatprep.subr.bf16.mxu0 0
    %1352 = vmatpush1.bf16.xpose.msra.mxu0 0
    %1353 = vmatprep.subr.bf16.mxu0 0
    %1354 = vmatpush1.bf16.xpose.msra.mxu0 0
    %1355 = vmatprep.mubr.bf16.mxu0 0
    %1356 = vmatmul.mubr.bf16.gmra.mrb[0].mxu0 %v1318
    %v1357 = vpop.f32.mrb[0].mxu0
    %v1358 = vadd.f32 0.0, %v1357
    %v1359 = vpop.f32.mrb[0].mxu0
    %v1360 = vpop.f32.mrb[0].mxu0
    %v1361 = vpop.f32.mrb[0].mxu0
    %1362 = vdwg.mxu0
    %1363 = vrot.lane.b32.xlu0 %v419, 64
    %v1364 = vpop.permute.xlu0 %1363
    %1365 = vrot.lane.b32.xlu0 %v431, 64
    %v1366 = vpop.permute.xlu0 %1365
    %v1368 = vsel %vm446, %v1364, 0
    %v1371 = vsel %vm446, %v1366, 0
    %1373 = vmatprep.subr.bf16.mxu0 0
    %1374 = vmatpush1.bf16.xpose.msra.mxu0 %v1371
    %1375 = vmatprep.subr.bf16.mxu0 0
    %1376 = vmatpush1.bf16.xpose.msra.mxu0 0
    %1377 = vmatprep.subr.bf16.mxu0 0
    %1378 = vmatpush1.bf16.xpose.msra.mxu0 0
    %1379 = vmatprep.subr.bf16.mxu0 0
    %1380 = vmatpush1.bf16.xpose.msra.mxu0 0
    %1381 = vmatprep.subr.bf16.mxu0 0
    %1382 = vmatpush1.bf16.xpose.msra.mxu0 0
    %1383 = vmatprep.subr.bf16.mxu0 0
    %1384 = vmatpush1.bf16.xpose.msra.mxu0 0
    %1385 = vmatprep.subr.bf16.mxu0 0
    %1386 = vmatpush1.bf16.xpose.msra.mxu0 0
    %1387 = vmatprep.subr.bf16.mxu0 0
    %1388 = vmatpush1.bf16.xpose.msra.mxu0 0
    %1389 = vmatprep.subr.bf16.mxu0 0
    %1390 = vmatpush1.bf16.xpose.msra.mxu0 0
    %1391 = vmatprep.subr.bf16.mxu0 0
    %1392 = vmatpush1.bf16.xpose.msra.mxu0 0
    %1393 = vmatprep.subr.bf16.mxu0 0
    %1394 = vmatpush1.bf16.xpose.msra.mxu0 0
    %1395 = vmatprep.subr.bf16.mxu0 0
    %1396 = vmatpush1.bf16.xpose.msra.mxu0 0
    %1397 = vmatprep.subr.bf16.mxu0 0
    %1398 = vmatpush1.bf16.xpose.msra.mxu0 0
    %1399 = vmatprep.subr.bf16.mxu0 0
    %1400 = vmatpush1.bf16.xpose.msra.mxu0 0
    %1401 = vmatprep.subr.bf16.mxu0 0
    %1402 = vmatpush1.bf16.xpose.msra.mxu0 0
    %1403 = vmatprep.subr.bf16.mxu0 0
    %1404 = vmatpush1.bf16.xpose.msra.mxu0 0
    %1405 = vmatprep.mubr.bf16.mxu0 0
    %1406 = vmatmul.mubr.bf16.gmra.mrb[0].mxu0 %v1368
    %v1407 = vpop.f32.mrb[0].mxu0
    %v1408 = vadd.f32 0.0, %v1407
    %v1409 = vpop.f32.mrb[0].mxu0
    %v1410 = vpop.f32.mrb[0].mxu0
    %v1411 = vpop.f32.mrb[0].mxu0
    %1412 = vdwg.mxu0
    %1413 = vrot.lane.b32.xlu0 %v420, 64
    %v1414 = vpop.permute.xlu0 %1413
    %1415 = vrot.lane.b32.xlu0 %v432, 64
    %v1416 = vpop.permute.xlu0 %1415
    %v1418 = vsel %vm446, %v1414, 0
    %v1421 = vsel %vm446, %v1416, 0
    %1423 = vmatprep.subr.bf16.mxu0 0
    %1424 = vmatpush1.bf16.xpose.msra.mxu0 %v1421
    %1425 = vmatprep.subr.bf16.mxu0 0
    %1426 = vmatpush1.bf16.xpose.msra.mxu0 0
    %1427 = vmatprep.subr.bf16.mxu0 0
    %1428 = vmatpush1.bf16.xpose.msra.mxu0 0
    %1429 = vmatprep.subr.bf16.mxu0 0
    %1430 = vmatpush1.bf16.xpose.msra.mxu0 0
    %1431 = vmatprep.subr.bf16.mxu0 0
    %1432 = vmatpush1.bf16.xpose.msra.mxu0 0
    %1433 = vmatprep.subr.bf16.mxu0 0
    %1434 = vmatpush1.bf16.xpose.msra.mxu0 0
    %1435 = vmatprep.subr.bf16.mxu0 0
    %1436 = vmatpush1.bf16.xpose.msra.mxu0 0
    %1437 = vmatprep.subr.bf16.mxu0 0
    %1438 = vmatpush1.bf16.xpose.msra.mxu0 0
    %1439 = vmatprep.subr.bf16.mxu0 0
    %1440 = vmatpush1.bf16.xpose.msra.mxu0 0
    %1441 = vmatprep.subr.bf16.mxu0 0
    %1442 = vmatpush1.bf16.xpose.msra.mxu0 0
    %1443 = vmatprep.subr.bf16.mxu0 0
    %1444 = vmatpush1.bf16.xpose.msra.mxu0 0
    %1445 = vmatprep.subr.bf16.mxu0 0
    %1446 = vmatpush1.bf16.xpose.msra.mxu0 0
    %1447 = vmatprep.subr.bf16.mxu0 0
    %1448 = vmatpush1.bf16.xpose.msra.mxu0 0
    %1449 = vmatprep.subr.bf16.mxu0 0
    %1450 = vmatpush1.bf16.xpose.msra.mxu0 0
    %1451 = vmatprep.subr.bf16.mxu0 0
    %1452 = vmatpush1.bf16.xpose.msra.mxu0 0
    %1453 = vmatprep.subr.bf16.mxu0 0
    %1454 = vmatpush1.bf16.xpose.msra.mxu0 0
    %1455 = vmatprep.mubr.bf16.mxu0 0
    %1456 = vmatmul.mubr.bf16.gmra.mrb[0].mxu0 %v1418
    %v1457 = vpop.f32.mrb[0].mxu0
    %v1458 = vadd.f32 0.0, %v1457
    %v1459 = vpop.f32.mrb[0].mxu0
    %v1460 = vpop.f32.mrb[0].mxu0
    %v1461 = vpop.f32.mrb[0].mxu0
    %1462 = vdwg.mxu0
    %1463 = vrot.lane.b32.xlu0 %v421, 64
    %v1464 = vpop.permute.xlu0 %1463
    %1465 = vrot.lane.b32.xlu0 %v433, 64
    %v1466 = vpop.permute.xlu0 %1465
    %v1468 = vsel %vm446, %v1464, 0
    %v1471 = vsel %vm446, %v1466, 0
    %1473 = vmatprep.subr.bf16.mxu0 0
    %1474 = vmatpush1.bf16.xpose.msra.mxu0 %v1471
    %1475 = vmatprep.subr.bf16.mxu0 0
    %1476 = vmatpush1.bf16.xpose.msra.mxu0 0
    %1477 = vmatprep.subr.bf16.mxu0 0
    %1478 = vmatpush1.bf16.xpose.msra.mxu0 0
    %1479 = vmatprep.subr.bf16.mxu0 0
    %1480 = vmatpush1.bf16.xpose.msra.mxu0 0
    %1481 = vmatprep.subr.bf16.mxu0 0
    %1482 = vmatpush1.bf16.xpose.msra.mxu0 0
    %1483 = vmatprep.subr.bf16.mxu0 0
    %1484 = vmatpush1.bf16.xpose.msra.mxu0 0
    %1485 = vmatprep.subr.bf16.mxu0 0
    %1486 = vmatpush1.bf16.xpose.msra.mxu0 0
    %1487 = vmatprep.subr.bf16.mxu0 0
    %1488 = vmatpush1.bf16.xpose.msra.mxu0 0
    %1489 = vmatprep.subr.bf16.mxu0 0
    %1490 = vmatpush1.bf16.xpose.msra.mxu0 0
    %1491 = vmatprep.subr.bf16.mxu0 0
    %1492 = vmatpush1.bf16.xpose.msra.mxu0 0
    %1493 = vmatprep.subr.bf16.mxu0 0
    %1494 = vmatpush1.bf16.xpose.msra.mxu0 0
    %1495 = vmatprep.subr.bf16.mxu0 0
    %1496 = vmatpush1.bf16.xpose.msra.mxu0 0
    %1497 = vmatprep.subr.bf16.mxu0 0
    %1498 = vmatpush1.bf16.xpose.msra.mxu0 0
    %1499 = vmatprep.subr.bf16.mxu0 0
    %1500 = vmatpush1.bf16.xpose.msra.mxu0 0
    %1501 = vmatprep.subr.bf16.mxu0 0
    %1502 = vmatpush1.bf16.xpose.msra.mxu0 0
    %1503 = vmatprep.subr.bf16.mxu0 0
    %1504 = vmatpush1.bf16.xpose.msra.mxu0 0
    %1505 = vmatprep.mubr.bf16.mxu0 0
    %1506 = vmatmul.mubr.bf16.gmra.mrb[0].mxu0 %v1468
    %v1507 = vpop.f32.mrb[0].mxu0
    %v1508 = vadd.f32 0.0, %v1507
    %v1509 = vpop.f32.mrb[0].mxu0
    %v1510 = vpop.f32.mrb[0].mxu0
    %v1511 = vpop.f32.mrb[0].mxu0
    %1512 = vdwg.mxu0
    %v1513 = vmul.f32 %v1358, 0.17677669
    %v1514 = vmul.f32 %v1408, 0.17677669
    %v1515 = vmul.f32 %v1458, 0.17677669
    %v1516 = vmul.f32 %v1508, 0.17677669
    %v1517 = vsel %vm635, %v1513, -inf
    %1518 = vmax.xlane.f32.xlu0 %v1517
    %v1519 = vpop.xlane.xlu0 %1518
    %v1520 = vsel %vm635, %v1514, -inf
    %1521 = vmax.xlane.f32.xlu0 %v1520
    %v1522 = vpop.xlane.xlu0 %1521
    %v1523 = vsel %vm635, %v1515, -inf
    %1524 = vmax.xlane.f32.xlu0 %v1523
    %v1525 = vpop.xlane.xlu0 %1524
    %v1526 = vsel %vm635, %v1516, -inf
    %1527 = vmax.xlane.f32.xlu0 %v1526
    %v1528 = vpop.xlane.xlu0 %1527
    %v1529 = vsub.f32 %v1513, %v1519
    %v1530 = vsub.f32 %v1514, %v1522
    %v1531 = vsub.f32 %v1515, %v1525
    %v1532 = vsub.f32 %v1516, %v1528
    %v1533 = vmul.f32 %v1529, 1.442695
    %v1534 = vpow.pop %v1533
    %v1535 = vmul.f32 %v1530, 1.442695
    %v1536 = vpow.pop %v1535
    %v1537 = vmul.f32 %v1531, 1.442695
    %v1538 = vpow.pop %v1537
    %v1539 = vmul.f32 %v1532, 1.442695
    %v1540 = vpow.pop %v1539
    %v1541 = vsel %vm635, %v1534, 0.0
    %1542 = vadd.xlane.f32.xlu0 %v1541
    %v1543 = vpop.xlane.xlu0 %1542
    %v1544 = vsel %vm635, %v1536, 0.0
    %1545 = vadd.xlane.f32.xlu0 %v1544
    %v1546 = vpop.xlane.xlu0 %1545
    %v1547 = vsel %vm635, %v1538, 0.0
    %1548 = vadd.xlane.f32.xlu0 %v1547
    %v1549 = vpop.xlane.xlu0 %1548
    %v1550 = vsel %vm635, %v1540, 0.0
    %1551 = vadd.xlane.f32.xlu0 %v1550
    %v1552 = vpop.xlane.xlu0 %1551
    %v1553 = vrcp.pop %v1543
    %v1554 = vrcp.pop %v1546
    %v1555 = vrcp.pop %v1549
    %v1556 = vrcp.pop %v1552
    %v1557 = vmul.f32 %v1534, %v1553
    %v1558 = vmul.f32 %v1536, %v1554
    %v1559 = vmul.f32 %v1538, %v1555
    %v1560 = vmul.f32 %v1540, %v1556
    %v1561 = vpack.c.bf16 %v1557, %v1557
    %v1562 = vpack.c.bf16 %v1558, %v1558
    %v1563 = vpack.c.bf16 %v1559, %v1559
    %v1564 = vpack.c.bf16 %v1560, %v1560
    %1565 = vrot.lane.b32.xlu0 %v442, 64
    %v1566 = vpop.permute.xlu0 %1565
    %v1568 = vsel %vm635, %v1561, 0
    %v1571 = vsel %vm687, %v1566, 0
    %1573 = vmatprep.subr.bf16.mxu0 0
    %1574 = vmatpush1.bf16.msra.mxu0 %v1571
    %1575 = vmatprep.subr.bf16.mxu0 0
    %1576 = vmatpush1.bf16.msra.mxu0 0
    %1577 = vmatprep.subr.bf16.mxu0 0
    %1578 = vmatpush1.bf16.msra.mxu0 0
    %1579 = vmatprep.subr.bf16.mxu0 0
    %1580 = vmatpush1.bf16.msra.mxu0 0
    %1581 = vmatprep.subr.bf16.mxu0 0
    %1582 = vmatpush1.bf16.msra.mxu0 0
    %1583 = vmatprep.subr.bf16.mxu0 0
    %1584 = vmatpush1.bf16.msra.mxu0 0
    %1585 = vmatprep.subr.bf16.mxu0 0
    %1586 = vmatpush1.bf16.msra.mxu0 0
    %1587 = vmatprep.subr.bf16.mxu0 0
    %1588 = vmatpush1.bf16.msra.mxu0 0
    %1589 = vmatprep.subr.bf16.mxu0 0
    %1590 = vmatpush1.bf16.msra.mxu0 0
    %1591 = vmatprep.subr.bf16.mxu0 0
    %1592 = vmatpush1.bf16.msra.mxu0 0
    %1593 = vmatprep.subr.bf16.mxu0 0
    %1594 = vmatpush1.bf16.msra.mxu0 0
    %1595 = vmatprep.subr.bf16.mxu0 0
    %1596 = vmatpush1.bf16.msra.mxu0 0
    %1597 = vmatprep.subr.bf16.mxu0 0
    %1598 = vmatpush1.bf16.msra.mxu0 0
    %1599 = vmatprep.subr.bf16.mxu0 0
    %1600 = vmatpush1.bf16.msra.mxu0 0
    %1601 = vmatprep.subr.bf16.mxu0 0
    %1602 = vmatpush1.bf16.msra.mxu0 0
    %1603 = vmatprep.subr.bf16.mxu0 0
    %1604 = vmatpush1.bf16.msra.mxu0 0
    %1605 = vmatprep.mubr.bf16.mxu0 0
    %1606 = vmatmul.mubr.bf16.gmra.mrb[0].mxu0 %v1568
    %v1607 = vpop.f32.mrb[0].mxu0
    %v1608 = vadd.f32 0.0, %v1607
    %v1609 = vpop.f32.mrb[0].mxu0
    %v1610 = vpop.f32.mrb[0].mxu0
    %v1611 = vpop.f32.mrb[0].mxu0
    %1612 = vdwg.mxu0
    %1613 = vrot.lane.b32.xlu0 %v443, 64
    %v1614 = vpop.permute.xlu0 %1613
    %v1616 = vsel %vm635, %v1562, 0
    %v1619 = vsel %vm687, %v1614, 0
    %1621 = vmatprep.subr.bf16.mxu0 0
    %1622 = vmatpush1.bf16.msra.mxu0 %v1619
    %1623 = vmatprep.subr.bf16.mxu0 0
    %1624 = vmatpush1.bf16.msra.mxu0 0
    %1625 = vmatprep.subr.bf16.mxu0 0
    %1626 = vmatpush1.bf16.msra.mxu0 0
    %1627 = vmatprep.subr.bf16.mxu0 0
    %1628 = vmatpush1.bf16.msra.mxu0 0
    %1629 = vmatprep.subr.bf16.mxu0 0
    %1630 = vmatpush1.bf16.msra.mxu0 0
    %1631 = vmatprep.subr.bf16.mxu0 0
    %1632 = vmatpush1.bf16.msra.mxu0 0
    %1633 = vmatprep.subr.bf16.mxu0 0
    %1634 = vmatpush1.bf16.msra.mxu0 0
    %1635 = vmatprep.subr.bf16.mxu0 0
    %1636 = vmatpush1.bf16.msra.mxu0 0
    %1637 = vmatprep.subr.bf16.mxu0 0
    %1638 = vmatpush1.bf16.msra.mxu0 0
    %1639 = vmatprep.subr.bf16.mxu0 0
    %1640 = vmatpush1.bf16.msra.mxu0 0
    %1641 = vmatprep.subr.bf16.mxu0 0
    %1642 = vmatpush1.bf16.msra.mxu0 0
    %1643 = vmatprep.subr.bf16.mxu0 0
    %1644 = vmatpush1.bf16.msra.mxu0 0
    %1645 = vmatprep.subr.bf16.mxu0 0
    %1646 = vmatpush1.bf16.msra.mxu0 0
    %1647 = vmatprep.subr.bf16.mxu0 0
    %1648 = vmatpush1.bf16.msra.mxu0 0
    %1649 = vmatprep.subr.bf16.mxu0 0
    %1650 = vmatpush1.bf16.msra.mxu0 0
    %1651 = vmatprep.subr.bf16.mxu0 0
    %1652 = vmatpush1.bf16.msra.mxu0 0
    %1653 = vmatprep.mubr.bf16.mxu0 0
    %1654 = vmatmul.mubr.bf16.gmra.mrb[0].mxu0 %v1616
    %v1655 = vpop.f32.mrb[0].mxu0
    %v1656 = vadd.f32 0.0, %v1655
    %v1657 = vpop.f32.mrb[0].mxu0
    %v1658 = vpop.f32.mrb[0].mxu0
    %v1659 = vpop.f32.mrb[0].mxu0
    %1660 = vdwg.mxu0
    %1661 = vrot.lane.b32.xlu0 %v444, 64
    %v1662 = vpop.permute.xlu0 %1661
    %v1664 = vsel %vm635, %v1563, 0
    %v1667 = vsel %vm687, %v1662, 0
    %1669 = vmatprep.subr.bf16.mxu0 0
    %1670 = vmatpush1.bf16.msra.mxu0 %v1667
    %1671 = vmatprep.subr.bf16.mxu0 0
    %1672 = vmatpush1.bf16.msra.mxu0 0
    %1673 = vmatprep.subr.bf16.mxu0 0
    %1674 = vmatpush1.bf16.msra.mxu0 0
    %1675 = vmatprep.subr.bf16.mxu0 0
    %1676 = vmatpush1.bf16.msra.mxu0 0
    %1677 = vmatprep.subr.bf16.mxu0 0
    %1678 = vmatpush1.bf16.msra.mxu0 0
    %1679 = vmatprep.subr.bf16.mxu0 0
    %1680 = vmatpush1.bf16.msra.mxu0 0
    %1681 = vmatprep.subr.bf16.mxu0 0
    %1682 = vmatpush1.bf16.msra.mxu0 0
    %1683 = vmatprep.subr.bf16.mxu0 0
    %1684 = vmatpush1.bf16.msra.mxu0 0
    %1685 = vmatprep.subr.bf16.mxu0 0
    %1686 = vmatpush1.bf16.msra.mxu0 0
    %1687 = vmatprep.subr.bf16.mxu0 0
    %1688 = vmatpush1.bf16.msra.mxu0 0
    %1689 = vmatprep.subr.bf16.mxu0 0
    %1690 = vmatpush1.bf16.msra.mxu0 0
    %1691 = vmatprep.subr.bf16.mxu0 0
    %1692 = vmatpush1.bf16.msra.mxu0 0
    %1693 = vmatprep.subr.bf16.mxu0 0
    %1694 = vmatpush1.bf16.msra.mxu0 0
    %1695 = vmatprep.subr.bf16.mxu0 0
    %1696 = vmatpush1.bf16.msra.mxu0 0
    %1697 = vmatprep.subr.bf16.mxu0 0
    %1698 = vmatpush1.bf16.msra.mxu0 0
    %1699 = vmatprep.subr.bf16.mxu0 0
    %1700 = vmatpush1.bf16.msra.mxu0 0
    %1701 = vmatprep.mubr.bf16.mxu0 0
    %1702 = vmatmul.mubr.bf16.gmra.mrb[0].mxu0 %v1664
    %v1703 = vpop.f32.mrb[0].mxu0
    %v1704 = vadd.f32 0.0, %v1703
    %v1705 = vpop.f32.mrb[0].mxu0
    %v1706 = vpop.f32.mrb[0].mxu0
    %v1707 = vpop.f32.mrb[0].mxu0
    %1708 = vdwg.mxu0
    %1709 = vrot.lane.b32.xlu0 %v445, 64
    %v1710 = vpop.permute.xlu0 %1709
    %v1712 = vsel %vm635, %v1564, 0
    %v1715 = vsel %vm687, %v1710, 0
    %1717 = vmatprep.subr.bf16.mxu0 0
    %1718 = vmatpush1.bf16.msra.mxu0 %v1715
    %1719 = vmatprep.subr.bf16.mxu0 0
    %1720 = vmatpush1.bf16.msra.mxu0 0
    %1721 = vmatprep.subr.bf16.mxu0 0
    %1722 = vmatpush1.bf16.msra.mxu0 0
    %1723 = vmatprep.subr.bf16.mxu0 0
    %1724 = vmatpush1.bf16.msra.mxu0 0
    %1725 = vmatprep.subr.bf16.mxu0 0
    %1726 = vmatpush1.bf16.msra.mxu0 0
    %1727 = vmatprep.subr.bf16.mxu0 0
    %1728 = vmatpush1.bf16.msra.mxu0 0
    %1729 = vmatprep.subr.bf16.mxu0 0
    %1730 = vmatpush1.bf16.msra.mxu0 0
    %1731 = vmatprep.subr.bf16.mxu0 0
    %1732 = vmatpush1.bf16.msra.mxu0 0
    %1733 = vmatprep.subr.bf16.mxu0 0
    %1734 = vmatpush1.bf16.msra.mxu0 0
    %1735 = vmatprep.subr.bf16.mxu0 0
    %1736 = vmatpush1.bf16.msra.mxu0 0
    %1737 = vmatprep.subr.bf16.mxu0 0
    %1738 = vmatpush1.bf16.msra.mxu0 0
    %1739 = vmatprep.subr.bf16.mxu0 0
    %1740 = vmatpush1.bf16.msra.mxu0 0
    %1741 = vmatprep.subr.bf16.mxu0 0
    %1742 = vmatpush1.bf16.msra.mxu0 0
    %1743 = vmatprep.subr.bf16.mxu0 0
    %1744 = vmatpush1.bf16.msra.mxu0 0
    %1745 = vmatprep.subr.bf16.mxu0 0
    %1746 = vmatpush1.bf16.msra.mxu0 0
    %1747 = vmatprep.subr.bf16.mxu0 0
    %1748 = vmatpush1.bf16.msra.mxu0 0
    %1749 = vmatprep.mubr.bf16.mxu0 0
    %1750 = vmatmul.mubr.bf16.gmra.mrb[0].mxu0 %v1712
    %v1751 = vpop.f32.mrb[0].mxu0
    %v1752 = vadd.f32 0.0, %v1751
    %v1753 = vpop.f32.mrb[0].mxu0
    %v1754 = vpop.f32.mrb[0].mxu0
    %v1755 = vpop.f32.mrb[0].mxu0
    %1756 = vdwg.mxu0
    %1757 = vrot.lane.b32.xlu0 %v418, 32
    %v1758 = vpop.permute.xlu0 %1757
    %1759 = vrot.lane.b32.xlu0 %v430, 32
    %v1760 = vpop.permute.xlu0 %1759
    %v1762 = vsel %vm446, %v1758, 0
    %v1765 = vsel %vm446, %v1760, 0
    %1767 = vmatprep.subr.bf16.mxu0 0
    %1768 = vmatpush1.bf16.xpose.msra.mxu0 %v1765
    %1769 = vmatprep.subr.bf16.mxu0 0
    %1770 = vmatpush1.bf16.xpose.msra.mxu0 0
    %1771 = vmatprep.subr.bf16.mxu0 0
    %1772 = vmatpush1.bf16.xpose.msra.mxu0 0
    %1773 = vmatprep.subr.bf16.mxu0 0
    %1774 = vmatpush1.bf16.xpose.msra.mxu0 0
    %1775 = vmatprep.subr.bf16.mxu0 0
    %1776 = vmatpush1.bf16.xpose.msra.mxu0 0
    %1777 = vmatprep.subr.bf16.mxu0 0
    %1778 = vmatpush1.bf16.xpose.msra.mxu0 0
    %1779 = vmatprep.subr.bf16.mxu0 0
    %1780 = vmatpush1.bf16.xpose.msra.mxu0 0
    %1781 = vmatprep.subr.bf16.mxu0 0
    %1782 = vmatpush1.bf16.xpose.msra.mxu0 0
    %1783 = vmatprep.subr.bf16.mxu0 0
    %1784 = vmatpush1.bf16.xpose.msra.mxu0 0
    %1785 = vmatprep.subr.bf16.mxu0 0
    %1786 = vmatpush1.bf16.xpose.msra.mxu0 0
    %1787 = vmatprep.subr.bf16.mxu0 0
    %1788 = vmatpush1.bf16.xpose.msra.mxu0 0
    %1789 = vmatprep.subr.bf16.mxu0 0
    %1790 = vmatpush1.bf16.xpose.msra.mxu0 0
    %1791 = vmatprep.subr.bf16.mxu0 0
    %1792 = vmatpush1.bf16.xpose.msra.mxu0 0
    %1793 = vmatprep.subr.bf16.mxu0 0
    %1794 = vmatpush1.bf16.xpose.msra.mxu0 0
    %1795 = vmatprep.subr.bf16.mxu0 0
    %1796 = vmatpush1.bf16.xpose.msra.mxu0 0
    %1797 = vmatprep.subr.bf16.mxu0 0
    %1798 = vmatpush1.bf16.xpose.msra.mxu0 0
    %1799 = vmatprep.mubr.bf16.mxu0 0
    %1800 = vmatmul.mubr.bf16.gmra.mrb[0].mxu0 %v1762
    %v1801 = vpop.f32.mrb[0].mxu0
    %v1802 = vadd.f32 0.0, %v1801
    %v1803 = vpop.f32.mrb[0].mxu0
    %v1804 = vpop.f32.mrb[0].mxu0
    %v1805 = vpop.f32.mrb[0].mxu0
    %1806 = vdwg.mxu0
    %1807 = vrot.lane.b32.xlu0 %v419, 32
    %v1808 = vpop.permute.xlu0 %1807
    %1809 = vrot.lane.b32.xlu0 %v431, 32
    %v1810 = vpop.permute.xlu0 %1809
    %v1812 = vsel %vm446, %v1808, 0
    %v1815 = vsel %vm446, %v1810, 0
    %1817 = vmatprep.subr.bf16.mxu0 0
    %1818 = vmatpush1.bf16.xpose.msra.mxu0 %v1815
    %1819 = vmatprep.subr.bf16.mxu0 0
    %1820 = vmatpush1.bf16.xpose.msra.mxu0 0
    %1821 = vmatprep.subr.bf16.mxu0 0
    %1822 = vmatpush1.bf16.xpose.msra.mxu0 0
    %1823 = vmatprep.subr.bf16.mxu0 0
    %1824 = vmatpush1.bf16.xpose.msra.mxu0 0
    %1825 = vmatprep.subr.bf16.mxu0 0
    %1826 = vmatpush1.bf16.xpose.msra.mxu0 0
    %1827 = vmatprep.subr.bf16.mxu0 0
    %1828 = vmatpush1.bf16.xpose.msra.mxu0 0
    %1829 = vmatprep.subr.bf16.mxu0 0
    %1830 = vmatpush1.bf16.xpose.msra.mxu0 0
    %1831 = vmatprep.subr.bf16.mxu0 0
    %1832 = vmatpush1.bf16.xpose.msra.mxu0 0
    %1833 = vmatprep.subr.bf16.mxu0 0
    %1834 = vmatpush1.bf16.xpose.msra.mxu0 0
    %1835 = vmatprep.subr.bf16.mxu0 0
    %1836 = vmatpush1.bf16.xpose.msra.mxu0 0
    %1837 = vmatprep.subr.bf16.mxu0 0
    %1838 = vmatpush1.bf16.xpose.msra.mxu0 0
    %1839 = vmatprep.subr.bf16.mxu0 0
    %1840 = vmatpush1.bf16.xpose.msra.mxu0 0
    %1841 = vmatprep.subr.bf16.mxu0 0
    %1842 = vmatpush1.bf16.xpose.msra.mxu0 0
    %1843 = vmatprep.subr.bf16.mxu0 0
    %1844 = vmatpush1.bf16.xpose.msra.mxu0 0
    %1845 = vmatprep.subr.bf16.mxu0 0
    %1846 = vmatpush1.bf16.xpose.msra.mxu0 0
    %1847 = vmatprep.subr.bf16.mxu0 0
    %1848 = vmatpush1.bf16.xpose.msra.mxu0 0
    %1849 = vmatprep.mubr.bf16.mxu0 0
    %1850 = vmatmul.mubr.bf16.gmra.mrb[0].mxu0 %v1812
    %v1851 = vpop.f32.mrb[0].mxu0
    %v1852 = vadd.f32 0.0, %v1851
    %v1853 = vpop.f32.mrb[0].mxu0
    %v1854 = vpop.f32.mrb[0].mxu0
    %v1855 = vpop.f32.mrb[0].mxu0
    %1856 = vdwg.mxu0
    %1857 = vrot.lane.b32.xlu0 %v420, 32
    %v1858 = vpop.permute.xlu0 %1857
    %1859 = vrot.lane.b32.xlu0 %v432, 32
    %v1860 = vpop.permute.xlu0 %1859
    %v1862 = vsel %vm446, %v1858, 0
    %v1865 = vsel %vm446, %v1860, 0
    %1867 = vmatprep.subr.bf16.mxu0 0
    %1868 = vmatpush1.bf16.xpose.msra.mxu0 %v1865
    %1869 = vmatprep.subr.bf16.mxu0 0
    %1870 = vmatpush1.bf16.xpose.msra.mxu0 0
    %1871 = vmatprep.subr.bf16.mxu0 0
    %1872 = vmatpush1.bf16.xpose.msra.mxu0 0
    %1873 = vmatprep.subr.bf16.mxu0 0
    %1874 = vmatpush1.bf16.xpose.msra.mxu0 0
    %1875 = vmatprep.subr.bf16.mxu0 0
    %1876 = vmatpush1.bf16.xpose.msra.mxu0 0
    %1877 = vmatprep.subr.bf16.mxu0 0
    %1878 = vmatpush1.bf16.xpose.msra.mxu0 0
    %1879 = vmatprep.subr.bf16.mxu0 0
    %1880 = vmatpush1.bf16.xpose.msra.mxu0 0
    %1881 = vmatprep.subr.bf16.mxu0 0
    %1882 = vmatpush1.bf16.xpose.msra.mxu0 0
    %1883 = vmatprep.subr.bf16.mxu0 0
    %1884 = vmatpush1.bf16.xpose.msra.mxu0 0
    %1885 = vmatprep.subr.bf16.mxu0 0
    %1886 = vmatpush1.bf16.xpose.msra.mxu0 0
    %1887 = vmatprep.subr.bf16.mxu0 0
    %1888 = vmatpush1.bf16.xpose.msra.mxu0 0
    %1889 = vmatprep.subr.bf16.mxu0 0
    %1890 = vmatpush1.bf16.xpose.msra.mxu0 0
    %1891 = vmatprep.subr.bf16.mxu0 0
    %1892 = vmatpush1.bf16.xpose.msra.mxu0 0
    %1893 = vmatprep.subr.bf16.mxu0 0
    %1894 = vmatpush1.bf16.xpose.msra.mxu0 0
    %1895 = vmatprep.subr.bf16.mxu0 0
    %1896 = vmatpush1.bf16.xpose.msra.mxu0 0
    %1897 = vmatprep.subr.bf16.mxu0 0
    %1898 = vmatpush1.bf16.xpose.msra.mxu0 0
    %1899 = vmatprep.mubr.bf16.mxu0 0
    %1900 = vmatmul.mubr.bf16.gmra.mrb[0].mxu0 %v1862
    %v1901 = vpop.f32.mrb[0].mxu0
    %v1902 = vadd.f32 0.0, %v1901
    %v1903 = vpop.f32.mrb[0].mxu0
    %v1904 = vpop.f32.mrb[0].mxu0
    %v1905 = vpop.f32.mrb[0].mxu0
    %1906 = vdwg.mxu0
    %1907 = vrot.lane.b32.xlu0 %v421, 32
    %v1908 = vpop.permute.xlu0 %1907
    %1909 = vrot.lane.b32.xlu0 %v433, 32
    %v1910 = vpop.permute.xlu0 %1909
    %v1912 = vsel %vm446, %v1908, 0
    %v1915 = vsel %vm446, %v1910, 0
    %1917 = vmatprep.subr.bf16.mxu0 0
    %1918 = vmatpush1.bf16.xpose.msra.mxu0 %v1915
    %1919 = vmatprep.subr.bf16.mxu0 0
    %1920 = vmatpush1.bf16.xpose.msra.mxu0 0
    %1921 = vmatprep.subr.bf16.mxu0 0
    %1922 = vmatpush1.bf16.xpose.msra.mxu0 0
    %1923 = vmatprep.subr.bf16.mxu0 0
    %1924 = vmatpush1.bf16.xpose.msra.mxu0 0
    %1925 = vmatprep.subr.bf16.mxu0 0
    %1926 = vmatpush1.bf16.xpose.msra.mxu0 0
    %1927 = vmatprep.subr.bf16.mxu0 0
    %1928 = vmatpush1.bf16.xpose.msra.mxu0 0
    %1929 = vmatprep.subr.bf16.mxu0 0
    %1930 = vmatpush1.bf16.xpose.msra.mxu0 0
    %1931 = vmatprep.subr.bf16.mxu0 0
    %1932 = vmatpush1.bf16.xpose.msra.mxu0 0
    %1933 = vmatprep.subr.bf16.mxu0 0
    %1934 = vmatpush1.bf16.xpose.msra.mxu0 0
    %1935 = vmatprep.subr.bf16.mxu0 0
    %1936 = vmatpush1.bf16.xpose.msra.mxu0 0
    %1937 = vmatprep.subr.bf16.mxu0 0
    %1938 = vmatpush1.bf16.xpose.msra.mxu0 0
    %1939 = vmatprep.subr.bf16.mxu0 0
    %1940 = vmatpush1.bf16.xpose.msra.mxu0 0
    %1941 = vmatprep.subr.bf16.mxu0 0
    %1942 = vmatpush1.bf16.xpose.msra.mxu0 0
    %1943 = vmatprep.subr.bf16.mxu0 0
    %1944 = vmatpush1.bf16.xpose.msra.mxu0 0
    %1945 = vmatprep.subr.bf16.mxu0 0
    %1946 = vmatpush1.bf16.xpose.msra.mxu0 0
    %1947 = vmatprep.subr.bf16.mxu0 0
    %1948 = vmatpush1.bf16.xpose.msra.mxu0 0
    %1949 = vmatprep.mubr.bf16.mxu0 0
    %1950 = vmatmul.mubr.bf16.gmra.mrb[0].mxu0 %v1912
    %v1951 = vpop.f32.mrb[0].mxu0
    %v1952 = vadd.f32 0.0, %v1951
    %v1953 = vpop.f32.mrb[0].mxu0
    %v1954 = vpop.f32.mrb[0].mxu0
    %v1955 = vpop.f32.mrb[0].mxu0
    %1956 = vdwg.mxu0
    %v1957 = vmul.f32 %v1802, 0.17677669
    %v1958 = vmul.f32 %v1852, 0.17677669
    %v1959 = vmul.f32 %v1902, 0.17677669
    %v1960 = vmul.f32 %v1952, 0.17677669
    %v1961 = vsel %vm635, %v1957, -inf
    %1962 = vmax.xlane.f32.xlu0 %v1961
    %v1963 = vpop.xlane.xlu0 %1962
    %v1964 = vsel %vm635, %v1958, -inf
    %1965 = vmax.xlane.f32.xlu0 %v1964
    %v1966 = vpop.xlane.xlu0 %1965
    %v1967 = vsel %vm635, %v1959, -inf
    %1968 = vmax.xlane.f32.xlu0 %v1967
    %v1969 = vpop.xlane.xlu0 %1968
    %v1970 = vsel %vm635, %v1960, -inf
    %1971 = vmax.xlane.f32.xlu0 %v1970
    %v1972 = vpop.xlane.xlu0 %1971
    %v1973 = vsub.f32 %v1957, %v1963
    %v1974 = vsub.f32 %v1958, %v1966
    %v1975 = vsub.f32 %v1959, %v1969
    %v1976 = vsub.f32 %v1960, %v1972
    %v1977 = vmul.f32 %v1973, 1.442695
    %v1978 = vpow.pop %v1977
    %v1979 = vmul.f32 %v1974, 1.442695
    %v1980 = vpow.pop %v1979
    %v1981 = vmul.f32 %v1975, 1.442695
    %v1982 = vpow.pop %v1981
    %v1983 = vmul.f32 %v1976, 1.442695
    %v1984 = vpow.pop %v1983
    %v1985 = vsel %vm635, %v1978, 0.0
    %1986 = vadd.xlane.f32.xlu0 %v1985
    %v1987 = vpop.xlane.xlu0 %1986
    %v1988 = vsel %vm635, %v1980, 0.0
    %1989 = vadd.xlane.f32.xlu0 %v1988
    %v1990 = vpop.xlane.xlu0 %1989
    %v1991 = vsel %vm635, %v1982, 0.0
    %1992 = vadd.xlane.f32.xlu0 %v1991
    %v1993 = vpop.xlane.xlu0 %1992
    %v1994 = vsel %vm635, %v1984, 0.0
    %1995 = vadd.xlane.f32.xlu0 %v1994
    %v1996 = vpop.xlane.xlu0 %1995
    %v1997 = vrcp.pop %v1987
    %v1998 = vrcp.pop %v1990
    %v1999 = vrcp.pop %v1993
    %v2000 = vrcp.pop %v1996
    %v2001 = vmul.f32 %v1978, %v1997
    %v2002 = vmul.f32 %v1980, %v1998
    %v2003 = vmul.f32 %v1982, %v1999
    %v2004 = vmul.f32 %v1984, %v2000
    %v2005 = vpack.c.bf16 %v2001, %v2001
    %v2006 = vpack.c.bf16 %v2002, %v2002
    %v2007 = vpack.c.bf16 %v2003, %v2003
    %v2008 = vpack.c.bf16 %v2004, %v2004
    %2009 = vrot.lane.b32.xlu0 %v442, 32
    %v2010 = vpop.permute.xlu0 %2009
    %v2012 = vsel %vm635, %v2005, 0
    %v2015 = vsel %vm687, %v2010, 0
    %2017 = vmatprep.subr.bf16.mxu0 0
    %2018 = vmatpush1.bf16.msra.mxu0 %v2015
    %2019 = vmatprep.subr.bf16.mxu0 0
    %2020 = vmatpush1.bf16.msra.mxu0 0
    %2021 = vmatprep.subr.bf16.mxu0 0
    %2022 = vmatpush1.bf16.msra.mxu0 0
    %2023 = vmatprep.subr.bf16.mxu0 0
    %2024 = vmatpush1.bf16.msra.mxu0 0
    %2025 = vmatprep.subr.bf16.mxu0 0
    %2026 = vmatpush1.bf16.msra.mxu0 0
    %2027 = vmatprep.subr.bf16.mxu0 0
    %2028 = vmatpush1.bf16.msra.mxu0 0
    %2029 = vmatprep.subr.bf16.mxu0 0
    %2030 = vmatpush1.bf16.msra.mxu0 0
    %2031 = vmatprep.subr.bf16.mxu0 0
    %2032 = vmatpush1.bf16.msra.mxu0 0
    %2033 = vmatprep.subr.bf16.mxu0 0
    %2034 = vmatpush1.bf16.msra.mxu0 0
    %2035 = vmatprep.subr.bf16.mxu0 0
    %2036 = vmatpush1.bf16.msra.mxu0 0
    %2037 = vmatprep.subr.bf16.mxu0 0
    %2038 = vmatpush1.bf16.msra.mxu0 0
    %2039 = vmatprep.subr.bf16.mxu0 0
    %2040 = vmatpush1.bf16.msra.mxu0 0
    %2041 = vmatprep.subr.bf16.mxu0 0
    %2042 = vmatpush1.bf16.msra.mxu0 0
    %2043 = vmatprep.subr.bf16.mxu0 0
    %2044 = vmatpush1.bf16.msra.mxu0 0
    %2045 = vmatprep.subr.bf16.mxu0 0
    %2046 = vmatpush1.bf16.msra.mxu0 0
    %2047 = vmatprep.subr.bf16.mxu0 0
    %2048 = vmatpush1.bf16.msra.mxu0 0
    %2049 = vmatprep.mubr.bf16.mxu0 0
    %2050 = vmatmul.mubr.bf16.gmra.mrb[0].mxu0 %v2012
    %v2051 = vpop.f32.mrb[0].mxu0
    %v2052 = vadd.f32 0.0, %v2051
    %v2053 = vpop.f32.mrb[0].mxu0
    %v2054 = vpop.f32.mrb[0].mxu0
    %v2055 = vpop.f32.mrb[0].mxu0
    %2056 = vdwg.mxu0
    %2057 = vrot.lane.b32.xlu0 %v443, 32
    %v2058 = vpop.permute.xlu0 %2057
    %v2060 = vsel %vm635, %v2006, 0
    %v2063 = vsel %vm687, %v2058, 0
    %2065 = vmatprep.subr.bf16.mxu0 0
    %2066 = vmatpush1.bf16.msra.mxu0 %v2063
    %2067 = vmatprep.subr.bf16.mxu0 0
    %2068 = vmatpush1.bf16.msra.mxu0 0
    %2069 = vmatprep.subr.bf16.mxu0 0
    %2070 = vmatpush1.bf16.msra.mxu0 0
    %2071 = vmatprep.subr.bf16.mxu0 0
    %2072 = vmatpush1.bf16.msra.mxu0 0
    %2073 = vmatprep.subr.bf16.mxu0 0
    %2074 = vmatpush1.bf16.msra.mxu0 0
    %2075 = vmatprep.subr.bf16.mxu0 0
    %2076 = vmatpush1.bf16.msra.mxu0 0
    %2077 = vmatprep.subr.bf16.mxu0 0
    %2078 = vmatpush1.bf16.msra.mxu0 0
    %2079 = vmatprep.subr.bf16.mxu0 0
    %2080 = vmatpush1.bf16.msra.mxu0 0
    %2081 = vmatprep.subr.bf16.mxu0 0
    %2082 = vmatpush1.bf16.msra.mxu0 0
    %2083 = vmatprep.subr.bf16.mxu0 0
    %2084 = vmatpush1.bf16.msra.mxu0 0
    %2085 = vmatprep.subr.bf16.mxu0 0
    %2086 = vmatpush1.bf16.msra.mxu0 0
    %2087 = vmatprep.subr.bf16.mxu0 0
    %2088 = vmatpush1.bf16.msra.mxu0 0
    %2089 = vmatprep.subr.bf16.mxu0 0
    %2090 = vmatpush1.bf16.msra.mxu0 0
    %2091 = vmatprep.subr.bf16.mxu0 0
    %2092 = vmatpush1.bf16.msra.mxu0 0
    %2093 = vmatprep.subr.bf16.mxu0 0
    %2094 = vmatpush1.bf16.msra.mxu0 0
    %2095 = vmatprep.subr.bf16.mxu0 0
    %2096 = vmatpush1.bf16.msra.mxu0 0
    %2097 = vmatprep.mubr.bf16.mxu0 0
    %2098 = vmatmul.mubr.bf16.gmra.mrb[0].mxu0 %v2060
    %v2099 = vpop.f32.mrb[0].mxu0
    %v2100 = vadd.f32 0.0, %v2099
    %v2101 = vpop.f32.mrb[0].mxu0
    %v2102 = vpop.f32.mrb[0].mxu0
    %v2103 = vpop.f32.mrb[0].mxu0
    %2104 = vdwg.mxu0
    %2105 = vrot.lane.b32.xlu0 %v444, 32
    %v2106 = vpop.permute.xlu0 %2105
    %v2108 = vsel %vm635, %v2007, 0
    %v2111 = vsel %vm687, %v2106, 0
    %2113 = vmatprep.subr.bf16.mxu0 0
    %2114 = vmatpush1.bf16.msra.mxu0 %v2111
    %2115 = vmatprep.subr.bf16.mxu0 0
    %2116 = vmatpush1.bf16.msra.mxu0 0
    %2117 = vmatprep.subr.bf16.mxu0 0
    %2118 = vmatpush1.bf16.msra.mxu0 0
    %2119 = vmatprep.subr.bf16.mxu0 0
    %2120 = vmatpush1.bf16.msra.mxu0 0
    %2121 = vmatprep.subr.bf16.mxu0 0
    %2122 = vmatpush1.bf16.msra.mxu0 0
    %2123 = vmatprep.subr.bf16.mxu0 0
    %2124 = vmatpush1.bf16.msra.mxu0 0
    %2125 = vmatprep.subr.bf16.mxu0 0
    %2126 = vmatpush1.bf16.msra.mxu0 0
    %2127 = vmatprep.subr.bf16.mxu0 0
    %2128 = vmatpush1.bf16.msra.mxu0 0
    %2129 = vmatprep.subr.bf16.mxu0 0
    %2130 = vmatpush1.bf16.msra.mxu0 0
    %2131 = vmatprep.subr.bf16.mxu0 0
    %2132 = vmatpush1.bf16.msra.mxu0 0
    %2133 = vmatprep.subr.bf16.mxu0 0
    %2134 = vmatpush1.bf16.msra.mxu0 0
    %2135 = vmatprep.subr.bf16.mxu0 0
    %2136 = vmatpush1.bf16.msra.mxu0 0
    %2137 = vmatprep.subr.bf16.mxu0 0
    %2138 = vmatpush1.bf16.msra.mxu0 0
    %2139 = vmatprep.subr.bf16.mxu0 0
    %2140 = vmatpush1.bf16.msra.mxu0 0
    %2141 = vmatprep.subr.bf16.mxu0 0
    %2142 = vmatpush1.bf16.msra.mxu0 0
    %2143 = vmatprep.subr.bf16.mxu0 0
    %2144 = vmatpush1.bf16.msra.mxu0 0
    %2145 = vmatprep.mubr.bf16.mxu0 0
    %2146 = vmatmul.mubr.bf16.gmra.mrb[0].mxu0 %v2108
    %v2147 = vpop.f32.mrb[0].mxu0
    %v2148 = vadd.f32 0.0, %v2147
    %v2149 = vpop.f32.mrb[0].mxu0
    %v2150 = vpop.f32.mrb[0].mxu0
    %v2151 = vpop.f32.mrb[0].mxu0
    %2152 = vdwg.mxu0
    %2153 = vrot.lane.b32.xlu0 %v445, 32
    %v2154 = vpop.permute.xlu0 %2153
    %v2156 = vsel %vm635, %v2008, 0
    %v2159 = vsel %vm687, %v2154, 0
    %2161 = vmatprep.subr.bf16.mxu0 0
    %2162 = vmatpush1.bf16.msra.mxu0 %v2159
    %2163 = vmatprep.subr.bf16.mxu0 0
    %2164 = vmatpush1.bf16.msra.mxu0 0
    %2165 = vmatprep.subr.bf16.mxu0 0
    %2166 = vmatpush1.bf16.msra.mxu0 0
    %2167 = vmatprep.subr.bf16.mxu0 0
    %2168 = vmatpush1.bf16.msra.mxu0 0
    %2169 = vmatprep.subr.bf16.mxu0 0
    %2170 = vmatpush1.bf16.msra.mxu0 0
    %2171 = vmatprep.subr.bf16.mxu0 0
    %2172 = vmatpush1.bf16.msra.mxu0 0
    %2173 = vmatprep.subr.bf16.mxu0 0
    %2174 = vmatpush1.bf16.msra.mxu0 0
    %2175 = vmatprep.subr.bf16.mxu0 0
    %2176 = vmatpush1.bf16.msra.mxu0 0
    %2177 = vmatprep.subr.bf16.mxu0 0
    %2178 = vmatpush1.bf16.msra.mxu0 0
    %2179 = vmatprep.subr.bf16.mxu0 0
    %2180 = vmatpush1.bf16.msra.mxu0 0
    %2181 = vmatprep.subr.bf16.mxu0 0
    %2182 = vmatpush1.bf16.msra.mxu0 0
    %2183 = vmatprep.subr.bf16.mxu0 0
    %2184 = vmatpush1.bf16.msra.mxu0 0
    %2185 = vmatprep.subr.bf16.mxu0 0
    %2186 = vmatpush1.bf16.msra.mxu0 0
    %2187 = vmatprep.subr.bf16.mxu0 0
    %2188 = vmatpush1.bf16.msra.mxu0 0
    %2189 = vmatprep.subr.bf16.mxu0 0
    %2190 = vmatpush1.bf16.msra.mxu0 0
    %2191 = vmatprep.subr.bf16.mxu0 0
    %2192 = vmatpush1.bf16.msra.mxu0 0
    %2193 = vmatprep.mubr.bf16.mxu0 0
    %2194 = vmatmul.mubr.bf16.gmra.mrb[0].mxu0 %v2156
    %v2195 = vpop.f32.mrb[0].mxu0
    %v2196 = vadd.f32 0.0, %v2195
    %v2197 = vpop.f32.mrb[0].mxu0
    %v2198 = vpop.f32.mrb[0].mxu0
    %v2199 = vpop.f32.mrb[0].mxu0
    %2200 = vdwg.mxu0
    %2205 = vrot.lane.b32.xlu0 %v1164, 32
    %v2206 = vpop.permute.xlu0 %2205
    %2207 = vrot.lane.b32.xlu0 %v1212, 32
    %v2208 = vpop.permute.xlu0 %2207
    %2209 = vrot.lane.b32.xlu0 %v1260, 32
    %v2210 = vpop.permute.xlu0 %2209
    %2211 = vrot.lane.b32.xlu0 %v1308, 32
    %v2212 = vpop.permute.xlu0 %2211
    %2221 = vrot.lane.b32.xlu0 %v1608, 64
    %v2222 = vpop.permute.xlu0 %2221
    %2223 = vrot.lane.b32.xlu0 %v1656, 64
    %v2224 = vpop.permute.xlu0 %2223
    %2225 = vrot.lane.b32.xlu0 %v1704, 64
    %v2226 = vpop.permute.xlu0 %2225
    %2227 = vrot.lane.b32.xlu0 %v1752, 64
    %v2228 = vpop.permute.xlu0 %2227
    %2237 = vrot.lane.b32.xlu0 %v2052, 96
    %v2238 = vpop.permute.xlu0 %2237
    %2239 = vrot.lane.b32.xlu0 %v2100, 96
    %v2240 = vpop.permute.xlu0 %2239
    %2241 = vrot.lane.b32.xlu0 %v2148, 96
    %v2242 = vpop.permute.xlu0 %2241
    %2243 = vrot.lane.b32.xlu0 %v2196, 96
    %v2244 = vpop.permute.xlu0 %2243
    %v2249 = vsel %vm446, %v726, %v2206
    %v2250 = vsel %vm446, %v772, %v2208
    %v2251 = vsel %vm446, %v818, %v2210
    %v2252 = vsel %vm446, %v864, %v2212
    %vm2253 = vcmask 523264
    %v2254 = vsel %vm2253, %v2249, %v2222
    %v2255 = vsel %vm2253, %v2250, %v2224
    %v2256 = vsel %vm2253, %v2251, %v2226
    %v2257 = vsel %vm2253, %v2252, %v2228
    %vm2258 = vcmask 785408
    %v2259 = vsel %vm2258, %v2254, %v2238
    %v2260 = vsel %vm2258, %v2255, %v2240
    %v2261 = vsel %vm2258, %v2256, %v2242
    %v2262 = vsel %vm2258, %v2257, %v2244
    %v2263 = vpack.c.bf16 %v2260, %v2259
    %v2264 = vpack.c.bf16 %v2262, %v2261
    %v2265 = vld [vmem:[#allocation8] sm:$0xf]
    %v2266 = vld [vmem:[#allocation8 + $0x4] sm:$0xf]
    %v2267 = vld [vmem:[#allocation8 + $0x8] sm:$0xf]
    %v2268 = vld [vmem:[#allocation8 + $0xc] sm:$0xf]
    %v2269 = vld [vmem:[#allocation8 + $0x10] sm:$0xf]
    %v2270 = vld [vmem:[#allocation8 + $0x14] sm:$0xf]
    %v2271 = vld [vmem:[#allocation8 + $0x18] sm:$0xf]
    %v2272 = vld [vmem:[#allocation8 + $0x1c] sm:$0xf]
    %v2273 = vld [vmem:[#allocation8 + $0x20] sm:$0xf]
    %v2274 = vld [vmem:[#allocation8 + $0x24] sm:$0xf]
    %v2275 = vld [vmem:[#allocation8 + $0x28] sm:$0xf]
    %v2276 = vld [vmem:[#allocation8 + $0x2c] sm:$0xf]
    %v2277 = vld [vmem:[#allocation8 + $0x30] sm:$0xf]
    %v2278 = vld [vmem:[#allocation8 + $0x34] sm:$0xf]
    %v2279 = vld [vmem:[#allocation8 + $0x38] sm:$0xf]
    %v2280 = vld [vmem:[#allocation8 + $0x3c] sm:$0xf]
    %v2281 = vld [vmem:[#allocation10] sm:$0x1]
    %v2283 = vlaneseq
    %v2284 = vshrl.u32 %v2283, 7
    %v2285 = vsub.s32 0, %v2284
    %v2286 = vrot.slane %v2281, %v2285
    %v2304 = vunpack.c.l.b16 %v2265
    %v2305 = vunpack.c.l.b16 %v2266
    %v2306 = vunpack.c.l.b16 %v2267
    %v2307 = vunpack.c.l.b16 %v2268
    %v2308 = vunpack.c.l.b16 %v2269
    %v2309 = vunpack.c.l.b16 %v2270
    %v2310 = vunpack.c.l.b16 %v2271
    %v2311 = vunpack.c.l.b16 %v2272
    %v2312 = vunpack.c.l.b16 %v2273
    %v2313 = vunpack.c.l.b16 %v2274
    %v2314 = vunpack.c.l.b16 %v2275
    %v2315 = vunpack.c.l.b16 %v2276
    %v2316 = vunpack.c.l.b16 %v2277
    %v2317 = vunpack.c.l.b16 %v2278
    %v2318 = vunpack.c.l.b16 %v2279
    %v2319 = vunpack.c.l.b16 %v2280
    %v2320 = vpack.c.b16 %v2305, %v2304
    %v2321 = vpack.c.b16 %v2307, %v2306
    %v2322 = vpack.c.b16 %v2309, %v2308
    %v2323 = vpack.c.b16 %v2311, %v2310
    %v2324 = vpack.c.b16 %v2313, %v2312
    %v2325 = vpack.c.b16 %v2315, %v2314
    %v2326 = vpack.c.b16 %v2317, %v2316
    %v2327 = vpack.c.b16 %v2319, %v2318
    %2336 = vmatprep.subr.bf16.mxu0 0
    %2337 = vmatpush1.bf16.msra.mxu0 %v2320
    %2338 = vmatprep.subr.bf16.mxu0 0
    %2339 = vmatpush1.bf16.msra.mxu0 %v2321
    %2340 = vmatprep.subr.bf16.mxu0 0
    %2341 = vmatpush1.bf16.msra.mxu0 %v2322
    %2342 = vmatprep.subr.bf16.mxu0 0
    %2343 = vmatpush1.bf16.msra.mxu0 %v2323
    %2344 = vmatprep.subr.bf16.mxu0 0
    %2345 = vmatpush1.bf16.msra.mxu0 %v2324
    %2346 = vmatprep.subr.bf16.mxu0 0
    %2347 = vmatpush1.bf16.msra.mxu0 %v2325
    %2348 = vmatprep.subr.bf16.mxu0 0
    %2349 = vmatpush1.bf16.msra.mxu0 %v2326
    %2350 = vmatprep.subr.bf16.mxu0 0
    %2351 = vmatpush1.bf16.msra.mxu0 %v2327
    %2352 = vmatprep.subr.bf16.mxu0 0
    %2353 = vmatpush1.bf16.msra.mxu0 0
    %2354 = vmatprep.subr.bf16.mxu0 0
    %2355 = vmatpush1.bf16.msra.mxu0 0
    %2356 = vmatprep.subr.bf16.mxu0 0
    %2357 = vmatpush1.bf16.msra.mxu0 0
    %2358 = vmatprep.subr.bf16.mxu0 0
    %2359 = vmatpush1.bf16.msra.mxu0 0
    %2360 = vmatprep.subr.bf16.mxu0 0
    %2361 = vmatpush1.bf16.msra.mxu0 0
    %2362 = vmatprep.subr.bf16.mxu0 0
    %2363 = vmatpush1.bf16.msra.mxu0 0
    %2364 = vmatprep.subr.bf16.mxu0 0
    %2365 = vmatpush1.bf16.msra.mxu0 0
    %2366 = vmatprep.subr.bf16.mxu0 0
    %2367 = vmatpush1.bf16.msra.mxu0 0
    %2368 = vmatprep.mubr.bf16.mxu0 0
    %2369 = vmatmul.mubr.bf16.gmra.mrb[0].mxu0 %v2263
    %v2370 = vpop.f32.mrb[0].mxu0
    %v2371 = vadd.f32 %v2286, %v2370
    %v2372 = vpop.f32.mrb[0].mxu0
    %v2373 = vpop.f32.mrb[0].mxu0
    %v2374 = vadd.f32 %v2286, %v2373
    %v2375 = vpop.f32.mrb[0].mxu0
    %2376 = vmatprep.mubr.bf16.mxu0 0
    %2377 = vmatmul.mubr.bf16.gmra.mrb[0].mxu0 %v2264
    %v2378 = vpop.f32.mrb[0].mxu0
    %v2379 = vadd.f32 %v2286, %v2378
    %v2380 = vpop.f32.mrb[0].mxu0
    %v2381 = vpop.f32.mrb[0].mxu0
    %v2382 = vadd.f32 %v2286, %v2381
    %v2383 = vpop.f32.mrb[0].mxu0
    %2384 = vdwg.mxu0
    %v2385 = vunpack.c.l.bf16 %v115
    %v2386 = vunpack.c.l.bf16 %v116
    %v2387 = vunpack.c.l.bf16 %v117
    %v2388 = vunpack.c.l.bf16 %v118
    %v2389 = vadd.f32 %v2385, %v2371
    %v2390 = vadd.f32 %v2386, %v2374
    %v2391 = vadd.f32 %v2387, %v2379
    %v2392 = vadd.f32 %v2388, %v2382
    %2393 = vadd.xlane.f32.xlu0 %v2389
    %v2394 = vpop.xlane.xlu0 %2393
    %2395 = vadd.xlane.f32.xlu0 %v2390
    %v2396 = vpop.xlane.xlu0 %2395
    %2397 = vadd.xlane.f32.xlu0 %v2391
    %v2398 = vpop.xlane.xlu0 %2397
    %2399 = vadd.xlane.f32.xlu0 %v2392
    %v2400 = vpop.xlane.xlu0 %2399
    %v2401 = vrcp.pop 128.0
    %v2402 = vmul.f32 %v2394, %v2401
    %v2403 = vmul.f32 %v2396, %v2401
    %v2404 = vmul.f32 %v2398, %v2401
    %v2405 = vmul.f32 %v2400, %v2401
    %v2406 = vsub.f32 %v2389, %v2402
    %v2407 = vsub.f32 %v2390, %v2403
    %v2408 = vsub.f32 %v2391, %v2404
    %v2409 = vsub.f32 %v2392, %v2405
    %v2410 = vmul.f32 %v2406, %v2406
    %v2411 = vmul.f32 %v2407, %v2407
    %v2412 = vmul.f32 %v2408, %v2408
    %v2413 = vmul.f32 %v2409, %v2409
    %2414 = vadd.xlane.f32.xlu0 %v2410
    %v2415 = vpop.xlane.xlu0 %2414
    %2416 = vadd.xlane.f32.xlu0 %v2411
    %v2417 = vpop.xlane.xlu0 %2416
    %2418 = vadd.xlane.f32.xlu0 %v2412
    %v2419 = vpop.xlane.xlu0 %2418
    %2420 = vadd.xlane.f32.xlu0 %v2413
    %v2421 = vpop.xlane.xlu0 %2420
    %v2422 = vmul.f32 %v2415, %v2401
    %v2423 = vmul.f32 %v2417, %v2401
    %v2424 = vmul.f32 %v2419, %v2401
    %v2425 = vmul.f32 %v2421, %v2401
    %v2426 = vadd.f32 %v2422, 1e-05
    %v2427 = vadd.f32 %v2423, 1e-05
    %v2428 = vadd.f32 %v2424, 1e-05
    %v2429 = vadd.f32 %v2425, 1e-05
    %v2430 = vrsqrt.pop %v2426
    %v2431 = vrsqrt.pop %v2427
    %v2432 = vrsqrt.pop %v2428
    %v2433 = vrsqrt.pop %v2429
    %v2434 = vmul.f32 %v2406, %v2430
    %v2435 = vmul.f32 %v2407, %v2431
    %v2436 = vmul.f32 %v2408, %v2432
    %v2437 = vmul.f32 %v2409, %v2433
    %v2438 = vld [vmem:[#allocation11] sm:$0x1]
    %v2440 = vlaneseq
    %v2441 = vshrl.u32 %v2440, 7
    %v2442 = vsub.s32 0, %v2441
    %v2443 = vrot.slane %v2438, %v2442
    %v2445 = vmul.f32 %v2434, %v2443
    %v2446 = vmul.f32 %v2435, %v2443
    %v2447 = vmul.f32 %v2436, %v2443
    %v2448 = vmul.f32 %v2437, %v2443
    %v2449 = vld [vmem:[#allocation13] sm:$0x1]
    %v2451 = vlaneseq
    %v2452 = vshrl.u32 %v2451, 7
    %v2453 = vsub.s32 0, %v2452
    %v2454 = vrot.slane %v2449, %v2453
    %v2456 = vadd.f32 %v2445, %v2454
    %v2457 = vadd.f32 %v2446, %v2454
    %v2458 = vadd.f32 %v2447, %v2454
    %v2459 = vadd.f32 %v2448, %v2454
    %v2460 = vpack.c.bf16 %v2456, %v2456
    %v2461 = vpack.c.bf16 %v2457, %v2457
    %v2462 = vpack.c.bf16 %v2458, %v2458
    %v2463 = vpack.c.bf16 %v2459, %v2459
    %2464 = vst [vmem:[#allocation14] sm:$0xf] %v2460
    %2465 = vst [vmem:[#allocation14 + $0x4] sm:$0xf] %v2461
    %2466 = vst [vmem:[#allocation14 + $0x8] sm:$0xf] %v2462
    %2467 = vst [vmem:[#allocation14 + $0xc] sm:$0xf] %v2463
    // Predicated region
    $region58: #{tpu_custom_call.1} parent=1 // pred_check
      _
    $region59: #{tpu_custom_call.1} parent=1 // pred_check_branch
      %2469 = sbr.rel (0) target = $region61
    $region60: #{tpu_custom_call.1} parent=1 // pred_region
      %s2471 = ssub.s32 256, 256
      %2472 = vsyncadd [#allocation4], %s2471
      %s2473 = sshll.u32 [#allocation14], 4
      %s2474 = int_to_ptr.vmem [resolvable:$true] %s2473
      %2479 = dma.vmem_to_hbm [thread:$0]  %s2474, 256, %s7, [#allocation4], 64, 64, 4
    $region61: #{tpu_custom_call.1} parent=1 // pred_fallthru
      _
    // Predicated region
    $region62: #{tpu_custom_call.1} parent=1 // pred_check
      _
    $region63: #{tpu_custom_call.1} parent=1 // pred_check_branch
      %2481 = sbr.rel (0) target = $region65
    $region64: #{tpu_custom_call.1} parent=1 // pred_region
      %2482 = dma.done [#allocation4], 256
    $region65: #{tpu_custom_call.1} parent=1 // pred_fallthru
      _
    %2483 = vsyncpa [#allocation3], 1
    %2484 = vsyncpa [#allocation6], 1
    %2485 = vsyncpa [#allocation9], 1
    %2486 = vsyncpa [#allocation12], 1
    %2487 = vsyncpa [#allocation4], 1

</llo_original>
